<compile_context>
chip_gen: v7x
topology: tpu7x:2x2x1
jax: 0.10.0
libtpu: 0.0.40
codegen_flags: <defaults>
</compile_context>

<pallas_src>
import functools

import jax
import jax.numpy as jnp
from jax.experimental import pallas as pl
from jax.experimental.pallas import tpu as pltpu


def _mss_kernel(wv_ref, wu_ref, b1_ref, w2_ref, b2_ref, v_ref, u_ref, o_ref, *, n_feat):
    # v_ref / u_ref / o_ref: (TR, 128) lane-dense f32 slabs (batch in lanes+sublanes).
    # wv/wu/b1/w2: (n_feat,) f32 in SMEM; b2: (1,) f32 in SMEM (already scaled by 1/ts).
    v = v_ref[...]
    u = u_ref[...]

    acc = jnp.zeros(v.shape, jnp.float32)
    # Fully unrolled feature loop: pure VPU broadcast-FMA math, no MXU.
    for f in range(n_feat):
        h = jnp.maximum(v * wv_ref[f] + u * wu_ref[f] + b1_ref[f], 0.0)
        acc = acc + w2_ref[f] * h

    o_ref[...] = acc + b2_ref[0]


def mechanical_ss_v2_forward(in_x, in_u, params, typical_ts=1.0):
    """JAX/Pallas equivalent of MechanicalStateSpaceSystemV2.forward.

    in_x: (..., 2) float32, in_u: (..., 1) float32.
    Returns dx: (..., 2) float32.
    """
    w1, b1, w2, b2 = params  # (2, n_feat), (n_feat,), (n_feat, 1), (1,)
    n_feat = w1.shape[1]
    inv_ts = float(1.0 / typical_ts)

    lead_shape = in_x.shape[:-1]
    v_flat = in_x[..., 1].reshape(-1).astype(jnp.float32)   # velocity column
    u_flat = in_u[..., 0].reshape(-1).astype(jnp.float32)
    B = v_flat.shape[0]

    # Lane-dense layout: batch -> (rows, 128). Row tile TR (sublanes) picks the
    # per-grid-step work size (TR * 128 rows per step).
    rows = -(-B // 128)
    if rows >= 256:
        TR = 64          # 8192 rows / step
    elif rows >= 64:
        TR = 32          # 4096 rows / step (keeps >=2 parallel steps for v7x)
    else:
        TR = max(8, ((rows + 7) // 8) * 8)
    rows_p = -(-rows // TR) * TR
    Bp = rows_p * 128
    if Bp != B:
        v_flat = jnp.pad(v_flat, (0, Bp - B))
        u_flat = jnp.pad(u_flat, (0, Bp - B))
    v2 = v_flat.reshape(rows_p, 128)
    u2 = u_flat.reshape(rows_p, 128)

    # SMEM scalar weights; fold 1/typical_ts into the output layer.
    wv = w1[0, :].astype(jnp.float32)                 # (n_feat,)
    wu = w1[1, :].astype(jnp.float32)                 # (n_feat,)
    b1f = b1.reshape(n_feat).astype(jnp.float32)      # (n_feat,)
    w2s = (w2.reshape(n_feat) * inv_ts).astype(jnp.float32)
    b2s = (b2.reshape(1) * inv_ts).astype(jnp.float32)

    kernel = functools.partial(_mss_kernel, n_feat=n_feat)
    smem_spec = pl.BlockSpec(memory_space=pltpu.MemorySpace.SMEM)

    dx_v_slab = pl.pallas_call(
        kernel,
        out_shape=jax.ShapeDtypeStruct((rows_p, 128), jnp.float32),
        grid=(rows_p // TR,),
        in_specs=[
            smem_spec,                                   # wv
            smem_spec,                                   # wu
            smem_spec,                                   # b1
            smem_spec,                                   # w2 * inv_ts
            smem_spec,                                   # b2 * inv_ts
            pl.BlockSpec((TR, 128), lambda i: (i, 0)),   # v slab
            pl.BlockSpec((TR, 128), lambda i: (i, 0)),   # u slab
        ],
        out_specs=pl.BlockSpec((TR, 128), lambda i: (i, 0)),
        compiler_params=pltpu.CompilerParams(
            dimension_semantics=("parallel",)),
    )(wv, wu, b1f, w2s, b2s, v2, u2)

    # Wrapper-side: drop padding, restore leading dims, concat velocity pass-through.
    dx_v = dx_v_slab.reshape(-1)[:B].reshape(*lead_shape, 1)
    vel = in_x[..., 1:2].astype(jnp.float32)
    return jnp.concatenate([vel, dx_v], axis=-1)


def init_params(key, n_feat=64, init_small=True):
    """Deterministic init matching the PyTorch module's init_small path."""
    k1, k2 = jax.random.split(key)
    std = 0.001 if init_small else 0.1
    w1 = std * jax.random.normal(k1, (2, n_feat), dtype=jnp.float32)
    b1 = jnp.zeros((n_feat,), dtype=jnp.float32)
    w2 = std * jax.random.normal(k2, (n_feat, 1), dtype=jnp.float32)
    b2 = jnp.zeros((1,), dtype=jnp.float32)
    return (w1, b1, w2, b2)


def _reference(in_x, in_u, params, typical_ts=1.0):
    w1, b1, w2, b2 = params
    xu = jnp.concatenate([in_x[..., 1:2], in_u], axis=-1)
    h = jnp.maximum(xu @ w1 + b1, 0.0)
    dx_v = (h @ w2 + b2) / typical_ts
    return jnp.concatenate([in_x[..., 1:2], dx_v], axis=-1)


if __name__ == "__main__":
    key = jax.random.PRNGKey(0)
    kp, kx, ku = jax.random.split(key, 3)

    n_feat = 64
    typical_ts = 1.0
    params = init_params(kp, n_feat=n_feat, init_small=True)

    # Small shapes: batch=2, seq=8, n_x=2, n_u=1 (arbitrary leading dims supported).
    in_x = jax.random.normal(kx, (2, 8, 2), dtype=jnp.float32)
    in_u = jax.random.normal(ku, (2, 8, 1), dtype=jnp.float32)

    dx = mechanical_ss_v2_forward(in_x, in_u, params, typical_ts)
    dx = jax.block_until_ready(dx)

    dx_ref = _reference(in_x, in_u, params, typical_ts)
    assert dx.shape == (2, 8, 2), dx.shape
    assert jnp.allclose(dx, dx_ref, atol=1e-5, rtol=1e-5), "mismatch vs JAX reference"

    print("KERNEL_OK")
</pallas_src>

<mosaic_0001>
module attributes {stable_mosaic.version = 11 : i64} {
  func.func @_mss_kernel(%arg0: i32, %arg1: memref<64xf32, #tpu.memory_space<smem>>, %arg2: memref<64xf32, #tpu.memory_space<smem>>, %arg3: memref<64xf32, #tpu.memory_space<smem>>, %arg4: memref<64xf32, #tpu.memory_space<smem>>, %arg5: memref<1xf32, #tpu.memory_space<smem>>, %arg6: memref<8x128xf32, #tpu.memory_space<vmem>>, %arg7: memref<8x128xf32, #tpu.memory_space<vmem>>, %arg8: memref<8x128xf32, #tpu.memory_space<vmem>>) attributes {dimension_semantics = [#tpu.dimension_semantics<parallel>], iteration_bounds = array<i64: 1>, scalar_prefetch = 0 : i64, scratch_operands = 0 : i64, tpu.core_type = #tpu.core_type<tc>, window_params = [{transform_indices = @transform_0, window_bounds = array<i64: 64>}, {transform_indices = @transform_1, window_bounds = array<i64: 64>}, {transform_indices = @transform_2, window_bounds = array<i64: 64>}, {transform_indices = @transform_3, window_bounds = array<i64: 64>}, {transform_indices = @transform_4, window_bounds = array<i64: 1>}, {transform_indices = @transform_5, window_bounds = array<i64: 8, 128>}, {transform_indices = @transform_6, window_bounds = array<i64: 8, 128>}, {transform_indices = @transform_7, window_bounds = array<i64: 8, 128>}]} {
    %c0 = arith.constant 0 : index
    %c0_0 = arith.constant 0 : index
    %0 = vector.load %arg6[%c0, %c0_0] : memref<8x128xf32, #tpu.memory_space<vmem>>, vector<8x128xf32>
    %c0_1 = arith.constant 0 : index
    %c0_2 = arith.constant 0 : index
    %1 = vector.load %arg7[%c0_1, %c0_2] : memref<8x128xf32, #tpu.memory_space<vmem>>, vector<8x128xf32>
    %cst = arith.constant 0.000000e+00 : f32
    %2 = vector.broadcast %cst : f32 to vector<8x128xf32>
    %c0_3 = arith.constant 0 : index
    %3 = memref.load %arg1[%c0_3] : memref<64xf32, #tpu.memory_space<smem>>
    %4 = vector.broadcast %3 : f32 to vector<8x128xf32>
    %5 = arith.mulf %0, %4 : vector<8x128xf32>
    %c0_4 = arith.constant 0 : index
    %6 = memref.load %arg2[%c0_4] : memref<64xf32, #tpu.memory_space<smem>>
    %7 = vector.broadcast %6 : f32 to vector<8x128xf32>
    %8 = arith.mulf %1, %7 : vector<8x128xf32>
    %9 = arith.addf %5, %8 : vector<8x128xf32>
    %c0_5 = arith.constant 0 : index
    %10 = memref.load %arg3[%c0_5] : memref<64xf32, #tpu.memory_space<smem>>
    %11 = vector.broadcast %10 : f32 to vector<8x128xf32>
    %12 = arith.addf %9, %11 : vector<8x128xf32>
    %cst_6 = arith.constant 0.000000e+00 : f32
    %13 = vector.broadcast %cst_6 : f32 to vector<8x128xf32>
    %14 = arith.maximumf %12, %13 : vector<8x128xf32>
    %c0_7 = arith.constant 0 : index
    %15 = memref.load %arg4[%c0_7] : memref<64xf32, #tpu.memory_space<smem>>
    %16 = vector.broadcast %15 : f32 to vector<8x128xf32>
    %17 = arith.mulf %16, %14 : vector<8x128xf32>
    %18 = arith.addf %2, %17 : vector<8x128xf32>
    %c1 = arith.constant 1 : index
    %19 = memref.load %arg1[%c1] : memref<64xf32, #tpu.memory_space<smem>>
    %20 = vector.broadcast %19 : f32 to vector<8x128xf32>
    %21 = arith.mulf %0, %20 : vector<8x128xf32>
    %c1_8 = arith.constant 1 : index
    %22 = memref.load %arg2[%c1_8] : memref<64xf32, #tpu.memory_space<smem>>
    %23 = vector.broadcast %22 : f32 to vector<8x128xf32>
    %24 = arith.mulf %1, %23 : vector<8x128xf32>
    %25 = arith.addf %21, %24 : vector<8x128xf32>
    %c1_9 = arith.constant 1 : index
    %26 = memref.load %arg3[%c1_9] : memref<64xf32, #tpu.memory_space<smem>>
    %27 = vector.broadcast %26 : f32 to vector<8x128xf32>
    %28 = arith.addf %25, %27 : vector<8x128xf32>
    %cst_10 = arith.constant 0.000000e+00 : f32
    %29 = vector.broadcast %cst_10 : f32 to vector<8x128xf32>
    %30 = arith.maximumf %28, %29 : vector<8x128xf32>
    %c1_11 = arith.constant 1 : index
    %31 = memref.load %arg4[%c1_11] : memref<64xf32, #tpu.memory_space<smem>>
    %32 = vector.broadcast %31 : f32 to vector<8x128xf32>
    %33 = arith.mulf %32, %30 : vector<8x128xf32>
    %34 = arith.addf %18, %33 : vector<8x128xf32>
    %c2 = arith.constant 2 : index
    %35 = memref.load %arg1[%c2] : memref<64xf32, #tpu.memory_space<smem>>
    %36 = vector.broadcast %35 : f32 to vector<8x128xf32>
    %37 = arith.mulf %0, %36 : vector<8x128xf32>
    %c2_12 = arith.constant 2 : index
    %38 = memref.load %arg2[%c2_12] : memref<64xf32, #tpu.memory_space<smem>>
    %39 = vector.broadcast %38 : f32 to vector<8x128xf32>
    %40 = arith.mulf %1, %39 : vector<8x128xf32>
    %41 = arith.addf %37, %40 : vector<8x128xf32>
    %c2_13 = arith.constant 2 : index
    %42 = memref.load %arg3[%c2_13] : memref<64xf32, #tpu.memory_space<smem>>
    %43 = vector.broadcast %42 : f32 to vector<8x128xf32>
    %44 = arith.addf %41, %43 : vector<8x128xf32>
    %cst_14 = arith.constant 0.000000e+00 : f32
    %45 = vector.broadcast %cst_14 : f32 to vector<8x128xf32>
    %46 = arith.maximumf %44, %45 : vector<8x128xf32>
    %c2_15 = arith.constant 2 : index
    %47 = memref.load %arg4[%c2_15] : memref<64xf32, #tpu.memory_space<smem>>
    %48 = vector.broadcast %47 : f32 to vector<8x128xf32>
    %49 = arith.mulf %48, %46 : vector<8x128xf32>
    %50 = arith.addf %34, %49 : vector<8x128xf32>
    %c3 = arith.constant 3 : index
    %51 = memref.load %arg1[%c3] : memref<64xf32, #tpu.memory_space<smem>>
    %52 = vector.broadcast %51 : f32 to vector<8x128xf32>
    %53 = arith.mulf %0, %52 : vector<8x128xf32>
    %c3_16 = arith.constant 3 : index
    %54 = memref.load %arg2[%c3_16] : memref<64xf32, #tpu.memory_space<smem>>
    %55 = vector.broadcast %54 : f32 to vector<8x128xf32>
    %56 = arith.mulf %1, %55 : vector<8x128xf32>
    %57 = arith.addf %53, %56 : vector<8x128xf32>
    %c3_17 = arith.constant 3 : index
    %58 = memref.load %arg3[%c3_17] : memref<64xf32, #tpu.memory_space<smem>>
    %59 = vector.broadcast %58 : f32 to vector<8x128xf32>
    %60 = arith.addf %57, %59 : vector<8x128xf32>
    %cst_18 = arith.constant 0.000000e+00 : f32
    %61 = vector.broadcast %cst_18 : f32 to vector<8x128xf32>
    %62 = arith.maximumf %60, %61 : vector<8x128xf32>
    %c3_19 = arith.constant 3 : index
    %63 = memref.load %arg4[%c3_19] : memref<64xf32, #tpu.memory_space<smem>>
    %64 = vector.broadcast %63 : f32 to vector<8x128xf32>
    %65 = arith.mulf %64, %62 : vector<8x128xf32>
    %66 = arith.addf %50, %65 : vector<8x128xf32>
    %c4 = arith.constant 4 : index
    %67 = memref.load %arg1[%c4] : memref<64xf32, #tpu.memory_space<smem>>
    %68 = vector.broadcast %67 : f32 to vector<8x128xf32>
    %69 = arith.mulf %0, %68 : vector<8x128xf32>
    %c4_20 = arith.constant 4 : index
    %70 = memref.load %arg2[%c4_20] : memref<64xf32, #tpu.memory_space<smem>>
    %71 = vector.broadcast %70 : f32 to vector<8x128xf32>
    %72 = arith.mulf %1, %71 : vector<8x128xf32>
    %73 = arith.addf %69, %72 : vector<8x128xf32>
    %c4_21 = arith.constant 4 : index
    %74 = memref.load %arg3[%c4_21] : memref<64xf32, #tpu.memory_space<smem>>
    %75 = vector.broadcast %74 : f32 to vector<8x128xf32>
    %76 = arith.addf %73, %75 : vector<8x128xf32>
    %cst_22 = arith.constant 0.000000e+00 : f32
    %77 = vector.broadcast %cst_22 : f32 to vector<8x128xf32>
    %78 = arith.maximumf %76, %77 : vector<8x128xf32>
    %c4_23 = arith.constant 4 : index
    %79 = memref.load %arg4[%c4_23] : memref<64xf32, #tpu.memory_space<smem>>
    %80 = vector.broadcast %79 : f32 to vector<8x128xf32>
    %81 = arith.mulf %80, %78 : vector<8x128xf32>
    %82 = arith.addf %66, %81 : vector<8x128xf32>
    %c5 = arith.constant 5 : index
    %83 = memref.load %arg1[%c5] : memref<64xf32, #tpu.memory_space<smem>>
    %84 = vector.broadcast %83 : f32 to vector<8x128xf32>
    %85 = arith.mulf %0, %84 : vector<8x128xf32>
    %c5_24 = arith.constant 5 : index
    %86 = memref.load %arg2[%c5_24] : memref<64xf32, #tpu.memory_space<smem>>
    %87 = vector.broadcast %86 : f32 to vector<8x128xf32>
    %88 = arith.mulf %1, %87 : vector<8x128xf32>
    %89 = arith.addf %85, %88 : vector<8x128xf32>
    %c5_25 = arith.constant 5 : index
    %90 = memref.load %arg3[%c5_25] : memref<64xf32, #tpu.memory_space<smem>>
    %91 = vector.broadcast %90 : f32 to vector<8x128xf32>
    %92 = arith.addf %89, %91 : vector<8x128xf32>
    %cst_26 = arith.constant 0.000000e+00 : f32
    %93 = vector.broadcast %cst_26 : f32 to vector<8x128xf32>
    %94 = arith.maximumf %92, %93 : vector<8x128xf32>
    %c5_27 = arith.constant 5 : index
    %95 = memref.load %arg4[%c5_27] : memref<64xf32, #tpu.memory_space<smem>>
    %96 = vector.broadcast %95 : f32 to vector<8x128xf32>
    %97 = arith.mulf %96, %94 : vector<8x128xf32>
    %98 = arith.addf %82, %97 : vector<8x128xf32>
    %c6 = arith.constant 6 : index
    %99 = memref.load %arg1[%c6] : memref<64xf32, #tpu.memory_space<smem>>
    %100 = vector.broadcast %99 : f32 to vector<8x128xf32>
    %101 = arith.mulf %0, %100 : vector<8x128xf32>
    %c6_28 = arith.constant 6 : index
    %102 = memref.load %arg2[%c6_28] : memref<64xf32, #tpu.memory_space<smem>>
    %103 = vector.broadcast %102 : f32 to vector<8x128xf32>
    %104 = arith.mulf %1, %103 : vector<8x128xf32>
    %105 = arith.addf %101, %104 : vector<8x128xf32>
    %c6_29 = arith.constant 6 : index
    %106 = memref.load %arg3[%c6_29] : memref<64xf32, #tpu.memory_space<smem>>
    %107 = vector.broadcast %106 : f32 to vector<8x128xf32>
    %108 = arith.addf %105, %107 : vector<8x128xf32>
    %cst_30 = arith.constant 0.000000e+00 : f32
    %109 = vector.broadcast %cst_30 : f32 to vector<8x128xf32>
    %110 = arith.maximumf %108, %109 : vector<8x128xf32>
    %c6_31 = arith.constant 6 : index
    %111 = memref.load %arg4[%c6_31] : memref<64xf32, #tpu.memory_space<smem>>
    %112 = vector.broadcast %111 : f32 to vector<8x128xf32>
    %113 = arith.mulf %112, %110 : vector<8x128xf32>
    %114 = arith.addf %98, %113 : vector<8x128xf32>
    %c7 = arith.constant 7 : index
    %115 = memref.load %arg1[%c7] : memref<64xf32, #tpu.memory_space<smem>>
    %116 = vector.broadcast %115 : f32 to vector<8x128xf32>
    %117 = arith.mulf %0, %116 : vector<8x128xf32>
    %c7_32 = arith.constant 7 : index
    %118 = memref.load %arg2[%c7_32] : memref<64xf32, #tpu.memory_space<smem>>
    %119 = vector.broadcast %118 : f32 to vector<8x128xf32>
    %120 = arith.mulf %1, %119 : vector<8x128xf32>
    %121 = arith.addf %117, %120 : vector<8x128xf32>
    %c7_33 = arith.constant 7 : index
    %122 = memref.load %arg3[%c7_33] : memref<64xf32, #tpu.memory_space<smem>>
    %123 = vector.broadcast %122 : f32 to vector<8x128xf32>
    %124 = arith.addf %121, %123 : vector<8x128xf32>
    %cst_34 = arith.constant 0.000000e+00 : f32
    %125 = vector.broadcast %cst_34 : f32 to vector<8x128xf32>
    %126 = arith.maximumf %124, %125 : vector<8x128xf32>
    %c7_35 = arith.constant 7 : index
    %127 = memref.load %arg4[%c7_35] : memref<64xf32, #tpu.memory_space<smem>>
    %128 = vector.broadcast %127 : f32 to vector<8x128xf32>
    %129 = arith.mulf %128, %126 : vector<8x128xf32>
    %130 = arith.addf %114, %129 : vector<8x128xf32>
    %c8 = arith.constant 8 : index
    %131 = memref.load %arg1[%c8] : memref<64xf32, #tpu.memory_space<smem>>
    %132 = vector.broadcast %131 : f32 to vector<8x128xf32>
    %133 = arith.mulf %0, %132 : vector<8x128xf32>
    %c8_36 = arith.constant 8 : index
    %134 = memref.load %arg2[%c8_36] : memref<64xf32, #tpu.memory_space<smem>>
    %135 = vector.broadcast %134 : f32 to vector<8x128xf32>
    %136 = arith.mulf %1, %135 : vector<8x128xf32>
    %137 = arith.addf %133, %136 : vector<8x128xf32>
    %c8_37 = arith.constant 8 : index
    %138 = memref.load %arg3[%c8_37] : memref<64xf32, #tpu.memory_space<smem>>
    %139 = vector.broadcast %138 : f32 to vector<8x128xf32>
    %140 = arith.addf %137, %139 : vector<8x128xf32>
    %cst_38 = arith.constant 0.000000e+00 : f32
    %141 = vector.broadcast %cst_38 : f32 to vector<8x128xf32>
    %142 = arith.maximumf %140, %141 : vector<8x128xf32>
    %c8_39 = arith.constant 8 : index
    %143 = memref.load %arg4[%c8_39] : memref<64xf32, #tpu.memory_space<smem>>
    %144 = vector.broadcast %143 : f32 to vector<8x128xf32>
    %145 = arith.mulf %144, %142 : vector<8x128xf32>
    %146 = arith.addf %130, %145 : vector<8x128xf32>
    %c9 = arith.constant 9 : index
    %147 = memref.load %arg1[%c9] : memref<64xf32, #tpu.memory_space<smem>>
    %148 = vector.broadcast %147 : f32 to vector<8x128xf32>
    %149 = arith.mulf %0, %148 : vector<8x128xf32>
    %c9_40 = arith.constant 9 : index
    %150 = memref.load %arg2[%c9_40] : memref<64xf32, #tpu.memory_space<smem>>
    %151 = vector.broadcast %150 : f32 to vector<8x128xf32>
    %152 = arith.mulf %1, %151 : vector<8x128xf32>
    %153 = arith.addf %149, %152 : vector<8x128xf32>
    %c9_41 = arith.constant 9 : index
    %154 = memref.load %arg3[%c9_41] : memref<64xf32, #tpu.memory_space<smem>>
    %155 = vector.broadcast %154 : f32 to vector<8x128xf32>
    %156 = arith.addf %153, %155 : vector<8x128xf32>
    %cst_42 = arith.constant 0.000000e+00 : f32
    %157 = vector.broadcast %cst_42 : f32 to vector<8x128xf32>
    %158 = arith.maximumf %156, %157 : vector<8x128xf32>
    %c9_43 = arith.constant 9 : index
    %159 = memref.load %arg4[%c9_43] : memref<64xf32, #tpu.memory_space<smem>>
    %160 = vector.broadcast %159 : f32 to vector<8x128xf32>
    %161 = arith.mulf %160, %158 : vector<8x128xf32>
    %162 = arith.addf %146, %161 : vector<8x128xf32>
    %c10 = arith.constant 10 : index
    %163 = memref.load %arg1[%c10] : memref<64xf32, #tpu.memory_space<smem>>
    %164 = vector.broadcast %163 : f32 to vector<8x128xf32>
    %165 = arith.mulf %0, %164 : vector<8x128xf32>
    %c10_44 = arith.constant 10 : index
    %166 = memref.load %arg2[%c10_44] : memref<64xf32, #tpu.memory_space<smem>>
    %167 = vector.broadcast %166 : f32 to vector<8x128xf32>
    %168 = arith.mulf %1, %167 : vector<8x128xf32>
    %169 = arith.addf %165, %168 : vector<8x128xf32>
    %c10_45 = arith.constant 10 : index
    %170 = memref.load %arg3[%c10_45] : memref<64xf32, #tpu.memory_space<smem>>
    %171 = vector.broadcast %170 : f32 to vector<8x128xf32>
    %172 = arith.addf %169, %171 : vector<8x128xf32>
    %cst_46 = arith.constant 0.000000e+00 : f32
    %173 = vector.broadcast %cst_46 : f32 to vector<8x128xf32>
    %174 = arith.maximumf %172, %173 : vector<8x128xf32>
    %c10_47 = arith.constant 10 : index
    %175 = memref.load %arg4[%c10_47] : memref<64xf32, #tpu.memory_space<smem>>
    %176 = vector.broadcast %175 : f32 to vector<8x128xf32>
    %177 = arith.mulf %176, %174 : vector<8x128xf32>
    %178 = arith.addf %162, %177 : vector<8x128xf32>
    %c11 = arith.constant 11 : index
    %179 = memref.load %arg1[%c11] : memref<64xf32, #tpu.memory_space<smem>>
    %180 = vector.broadcast %179 : f32 to vector<8x128xf32>
    %181 = arith.mulf %0, %180 : vector<8x128xf32>
    %c11_48 = arith.constant 11 : index
    %182 = memref.load %arg2[%c11_48] : memref<64xf32, #tpu.memory_space<smem>>
    %183 = vector.broadcast %182 : f32 to vector<8x128xf32>
    %184 = arith.mulf %1, %183 : vector<8x128xf32>
    %185 = arith.addf %181, %184 : vector<8x128xf32>
    %c11_49 = arith.constant 11 : index
    %186 = memref.load %arg3[%c11_49] : memref<64xf32, #tpu.memory_space<smem>>
    %187 = vector.broadcast %186 : f32 to vector<8x128xf32>
    %188 = arith.addf %185, %187 : vector<8x128xf32>
    %cst_50 = arith.constant 0.000000e+00 : f32
    %189 = vector.broadcast %cst_50 : f32 to vector<8x128xf32>
    %190 = arith.maximumf %188, %189 : vector<8x128xf32>
    %c11_51 = arith.constant 11 : index
    %191 = memref.load %arg4[%c11_51] : memref<64xf32, #tpu.memory_space<smem>>
    %192 = vector.broadcast %191 : f32 to vector<8x128xf32>
    %193 = arith.mulf %192, %190 : vector<8x128xf32>
    %194 = arith.addf %178, %193 : vector<8x128xf32>
    %c12 = arith.constant 12 : index
    %195 = memref.load %arg1[%c12] : memref<64xf32, #tpu.memory_space<smem>>
    %196 = vector.broadcast %195 : f32 to vector<8x128xf32>
    %197 = arith.mulf %0, %196 : vector<8x128xf32>
    %c12_52 = arith.constant 12 : index
    %198 = memref.load %arg2[%c12_52] : memref<64xf32, #tpu.memory_space<smem>>
    %199 = vector.broadcast %198 : f32 to vector<8x128xf32>
    %200 = arith.mulf %1, %199 : vector<8x128xf32>
    %201 = arith.addf %197, %200 : vector<8x128xf32>
    %c12_53 = arith.constant 12 : index
    %202 = memref.load %arg3[%c12_53] : memref<64xf32, #tpu.memory_space<smem>>
    %203 = vector.broadcast %202 : f32 to vector<8x128xf32>
    %204 = arith.addf %201, %203 : vector<8x128xf32>
    %cst_54 = arith.constant 0.000000e+00 : f32
    %205 = vector.broadcast %cst_54 : f32 to vector<8x128xf32>
    %206 = arith.maximumf %204, %205 : vector<8x128xf32>
    %c12_55 = arith.constant 12 : index
    %207 = memref.load %arg4[%c12_55] : memref<64xf32, #tpu.memory_space<smem>>
    %208 = vector.broadcast %207 : f32 to vector<8x128xf32>
    %209 = arith.mulf %208, %206 : vector<8x128xf32>
    %210 = arith.addf %194, %209 : vector<8x128xf32>
    %c13 = arith.constant 13 : index
    %211 = memref.load %arg1[%c13] : memref<64xf32, #tpu.memory_space<smem>>
    %212 = vector.broadcast %211 : f32 to vector<8x128xf32>
    %213 = arith.mulf %0, %212 : vector<8x128xf32>
    %c13_56 = arith.constant 13 : index
    %214 = memref.load %arg2[%c13_56] : memref<64xf32, #tpu.memory_space<smem>>
    %215 = vector.broadcast %214 : f32 to vector<8x128xf32>
    %216 = arith.mulf %1, %215 : vector<8x128xf32>
    %217 = arith.addf %213, %216 : vector<8x128xf32>
    %c13_57 = arith.constant 13 : index
    %218 = memref.load %arg3[%c13_57] : memref<64xf32, #tpu.memory_space<smem>>
    %219 = vector.broadcast %218 : f32 to vector<8x128xf32>
    %220 = arith.addf %217, %219 : vector<8x128xf32>
    %cst_58 = arith.constant 0.000000e+00 : f32
    %221 = vector.broadcast %cst_58 : f32 to vector<8x128xf32>
    %222 = arith.maximumf %220, %221 : vector<8x128xf32>
    %c13_59 = arith.constant 13 : index
    %223 = memref.load %arg4[%c13_59] : memref<64xf32, #tpu.memory_space<smem>>
    %224 = vector.broadcast %223 : f32 to vector<8x128xf32>
    %225 = arith.mulf %224, %222 : vector<8x128xf32>
    %226 = arith.addf %210, %225 : vector<8x128xf32>
    %c14 = arith.constant 14 : index
    %227 = memref.load %arg1[%c14] : memref<64xf32, #tpu.memory_space<smem>>
    %228 = vector.broadcast %227 : f32 to vector<8x128xf32>
    %229 = arith.mulf %0, %228 : vector<8x128xf32>
    %c14_60 = arith.constant 14 : index
    %230 = memref.load %arg2[%c14_60] : memref<64xf32, #tpu.memory_space<smem>>
    %231 = vector.broadcast %230 : f32 to vector<8x128xf32>
    %232 = arith.mulf %1, %231 : vector<8x128xf32>
    %233 = arith.addf %229, %232 : vector<8x128xf32>
    %c14_61 = arith.constant 14 : index
    %234 = memref.load %arg3[%c14_61] : memref<64xf32, #tpu.memory_space<smem>>
    %235 = vector.broadcast %234 : f32 to vector<8x128xf32>
    %236 = arith.addf %233, %235 : vector<8x128xf32>
    %cst_62 = arith.constant 0.000000e+00 : f32
    %237 = vector.broadcast %cst_62 : f32 to vector<8x128xf32>
    %238 = arith.maximumf %236, %237 : vector<8x128xf32>
    %c14_63 = arith.constant 14 : index
    %239 = memref.load %arg4[%c14_63] : memref<64xf32, #tpu.memory_space<smem>>
    %240 = vector.broadcast %239 : f32 to vector<8x128xf32>
    %241 = arith.mulf %240, %238 : vector<8x128xf32>
    %242 = arith.addf %226, %241 : vector<8x128xf32>
    %c15 = arith.constant 15 : index
    %243 = memref.load %arg1[%c15] : memref<64xf32, #tpu.memory_space<smem>>
    %244 = vector.broadcast %243 : f32 to vector<8x128xf32>
    %245 = arith.mulf %0, %244 : vector<8x128xf32>
    %c15_64 = arith.constant 15 : index
    %246 = memref.load %arg2[%c15_64] : memref<64xf32, #tpu.memory_space<smem>>
    %247 = vector.broadcast %246 : f32 to vector<8x128xf32>
    %248 = arith.mulf %1, %247 : vector<8x128xf32>
    %249 = arith.addf %245, %248 : vector<8x128xf32>
    %c15_65 = arith.constant 15 : index
    %250 = memref.load %arg3[%c15_65] : memref<64xf32, #tpu.memory_space<smem>>
    %251 = vector.broadcast %250 : f32 to vector<8x128xf32>
    %252 = arith.addf %249, %251 : vector<8x128xf32>
    %cst_66 = arith.constant 0.000000e+00 : f32
    %253 = vector.broadcast %cst_66 : f32 to vector<8x128xf32>
    %254 = arith.maximumf %252, %253 : vector<8x128xf32>
    %c15_67 = arith.constant 15 : index
    %255 = memref.load %arg4[%c15_67] : memref<64xf32, #tpu.memory_space<smem>>
    %256 = vector.broadcast %255 : f32 to vector<8x128xf32>
    %257 = arith.mulf %256, %254 : vector<8x128xf32>
    %258 = arith.addf %242, %257 : vector<8x128xf32>
    %c16 = arith.constant 16 : index
    %259 = memref.load %arg1[%c16] : memref<64xf32, #tpu.memory_space<smem>>
    %260 = vector.broadcast %259 : f32 to vector<8x128xf32>
    %261 = arith.mulf %0, %260 : vector<8x128xf32>
    %c16_68 = arith.constant 16 : index
    %262 = memref.load %arg2[%c16_68] : memref<64xf32, #tpu.memory_space<smem>>
    %263 = vector.broadcast %262 : f32 to vector<8x128xf32>
    %264 = arith.mulf %1, %263 : vector<8x128xf32>
    %265 = arith.addf %261, %264 : vector<8x128xf32>
    %c16_69 = arith.constant 16 : index
    %266 = memref.load %arg3[%c16_69] : memref<64xf32, #tpu.memory_space<smem>>
    %267 = vector.broadcast %266 : f32 to vector<8x128xf32>
    %268 = arith.addf %265, %267 : vector<8x128xf32>
    %cst_70 = arith.constant 0.000000e+00 : f32
    %269 = vector.broadcast %cst_70 : f32 to vector<8x128xf32>
    %270 = arith.maximumf %268, %269 : vector<8x128xf32>
    %c16_71 = arith.constant 16 : index
    %271 = memref.load %arg4[%c16_71] : memref<64xf32, #tpu.memory_space<smem>>
    %272 = vector.broadcast %271 : f32 to vector<8x128xf32>
    %273 = arith.mulf %272, %270 : vector<8x128xf32>
    %274 = arith.addf %258, %273 : vector<8x128xf32>
    %c17 = arith.constant 17 : index
    %275 = memref.load %arg1[%c17] : memref<64xf32, #tpu.memory_space<smem>>
    %276 = vector.broadcast %275 : f32 to vector<8x128xf32>
    %277 = arith.mulf %0, %276 : vector<8x128xf32>
    %c17_72 = arith.constant 17 : index
    %278 = memref.load %arg2[%c17_72] : memref<64xf32, #tpu.memory_space<smem>>
    %279 = vector.broadcast %278 : f32 to vector<8x128xf32>
    %280 = arith.mulf %1, %279 : vector<8x128xf32>
    %281 = arith.addf %277, %280 : vector<8x128xf32>
    %c17_73 = arith.constant 17 : index
    %282 = memref.load %arg3[%c17_73] : memref<64xf32, #tpu.memory_space<smem>>
    %283 = vector.broadcast %282 : f32 to vector<8x128xf32>
    %284 = arith.addf %281, %283 : vector<8x128xf32>
    %cst_74 = arith.constant 0.000000e+00 : f32
    %285 = vector.broadcast %cst_74 : f32 to vector<8x128xf32>
    %286 = arith.maximumf %284, %285 : vector<8x128xf32>
    %c17_75 = arith.constant 17 : index
    %287 = memref.load %arg4[%c17_75] : memref<64xf32, #tpu.memory_space<smem>>
    %288 = vector.broadcast %287 : f32 to vector<8x128xf32>
    %289 = arith.mulf %288, %286 : vector<8x128xf32>
    %290 = arith.addf %274, %289 : vector<8x128xf32>
    %c18 = arith.constant 18 : index
    %291 = memref.load %arg1[%c18] : memref<64xf32, #tpu.memory_space<smem>>
    %292 = vector.broadcast %291 : f32 to vector<8x128xf32>
    %293 = arith.mulf %0, %292 : vector<8x128xf32>
    %c18_76 = arith.constant 18 : index
    %294 = memref.load %arg2[%c18_76] : memref<64xf32, #tpu.memory_space<smem>>
    %295 = vector.broadcast %294 : f32 to vector<8x128xf32>
    %296 = arith.mulf %1, %295 : vector<8x128xf32>
    %297 = arith.addf %293, %296 : vector<8x128xf32>
    %c18_77 = arith.constant 18 : index
    %298 = memref.load %arg3[%c18_77] : memref<64xf32, #tpu.memory_space<smem>>
    %299 = vector.broadcast %298 : f32 to vector<8x128xf32>
    %300 = arith.addf %297, %299 : vector<8x128xf32>
    %cst_78 = arith.constant 0.000000e+00 : f32
    %301 = vector.broadcast %cst_78 : f32 to vector<8x128xf32>
    %302 = arith.maximumf %300, %301 : vector<8x128xf32>
    %c18_79 = arith.constant 18 : index
    %303 = memref.load %arg4[%c18_79] : memref<64xf32, #tpu.memory_space<smem>>
    %304 = vector.broadcast %303 : f32 to vector<8x128xf32>
    %305 = arith.mulf %304, %302 : vector<8x128xf32>
    %306 = arith.addf %290, %305 : vector<8x128xf32>
    %c19 = arith.constant 19 : index
    %307 = memref.load %arg1[%c19] : memref<64xf32, #tpu.memory_space<smem>>
    %308 = vector.broadcast %307 : f32 to vector<8x128xf32>
    %309 = arith.mulf %0, %308 : vector<8x128xf32>
    %c19_80 = arith.constant 19 : index
    %310 = memref.load %arg2[%c19_80] : memref<64xf32, #tpu.memory_space<smem>>
    %311 = vector.broadcast %310 : f32 to vector<8x128xf32>
    %312 = arith.mulf %1, %311 : vector<8x128xf32>
    %313 = arith.addf %309, %312 : vector<8x128xf32>
    %c19_81 = arith.constant 19 : index
    %314 = memref.load %arg3[%c19_81] : memref<64xf32, #tpu.memory_space<smem>>
    %315 = vector.broadcast %314 : f32 to vector<8x128xf32>
    %316 = arith.addf %313, %315 : vector<8x128xf32>
    %cst_82 = arith.constant 0.000000e+00 : f32
    %317 = vector.broadcast %cst_82 : f32 to vector<8x128xf32>
    %318 = arith.maximumf %316, %317 : vector<8x128xf32>
    %c19_83 = arith.constant 19 : index
    %319 = memref.load %arg4[%c19_83] : memref<64xf32, #tpu.memory_space<smem>>
    %320 = vector.broadcast %319 : f32 to vector<8x128xf32>
    %321 = arith.mulf %320, %318 : vector<8x128xf32>
    %322 = arith.addf %306, %321 : vector<8x128xf32>
    %c20 = arith.constant 20 : index
    %323 = memref.load %arg1[%c20] : memref<64xf32, #tpu.memory_space<smem>>
    %324 = vector.broadcast %323 : f32 to vector<8x128xf32>
    %325 = arith.mulf %0, %324 : vector<8x128xf32>
    %c20_84 = arith.constant 20 : index
    %326 = memref.load %arg2[%c20_84] : memref<64xf32, #tpu.memory_space<smem>>
    %327 = vector.broadcast %326 : f32 to vector<8x128xf32>
    %328 = arith.mulf %1, %327 : vector<8x128xf32>
    %329 = arith.addf %325, %328 : vector<8x128xf32>
    %c20_85 = arith.constant 20 : index
    %330 = memref.load %arg3[%c20_85] : memref<64xf32, #tpu.memory_space<smem>>
    %331 = vector.broadcast %330 : f32 to vector<8x128xf32>
    %332 = arith.addf %329, %331 : vector<8x128xf32>
    %cst_86 = arith.constant 0.000000e+00 : f32
    %333 = vector.broadcast %cst_86 : f32 to vector<8x128xf32>
    %334 = arith.maximumf %332, %333 : vector<8x128xf32>
    %c20_87 = arith.constant 20 : index
    %335 = memref.load %arg4[%c20_87] : memref<64xf32, #tpu.memory_space<smem>>
    %336 = vector.broadcast %335 : f32 to vector<8x128xf32>
    %337 = arith.mulf %336, %334 : vector<8x128xf32>
    %338 = arith.addf %322, %337 : vector<8x128xf32>
    %c21 = arith.constant 21 : index
    %339 = memref.load %arg1[%c21] : memref<64xf32, #tpu.memory_space<smem>>
    %340 = vector.broadcast %339 : f32 to vector<8x128xf32>
    %341 = arith.mulf %0, %340 : vector<8x128xf32>
    %c21_88 = arith.constant 21 : index
    %342 = memref.load %arg2[%c21_88] : memref<64xf32, #tpu.memory_space<smem>>
    %343 = vector.broadcast %342 : f32 to vector<8x128xf32>
    %344 = arith.mulf %1, %343 : vector<8x128xf32>
    %345 = arith.addf %341, %344 : vector<8x128xf32>
    %c21_89 = arith.constant 21 : index
    %346 = memref.load %arg3[%c21_89] : memref<64xf32, #tpu.memory_space<smem>>
    %347 = vector.broadcast %346 : f32 to vector<8x128xf32>
    %348 = arith.addf %345, %347 : vector<8x128xf32>
    %cst_90 = arith.constant 0.000000e+00 : f32
    %349 = vector.broadcast %cst_90 : f32 to vector<8x128xf32>
    %350 = arith.maximumf %348, %349 : vector<8x128xf32>
    %c21_91 = arith.constant 21 : index
    %351 = memref.load %arg4[%c21_91] : memref<64xf32, #tpu.memory_space<smem>>
    %352 = vector.broadcast %351 : f32 to vector<8x128xf32>
    %353 = arith.mulf %352, %350 : vector<8x128xf32>
    %354 = arith.addf %338, %353 : vector<8x128xf32>
    %c22 = arith.constant 22 : index
    %355 = memref.load %arg1[%c22] : memref<64xf32, #tpu.memory_space<smem>>
    %356 = vector.broadcast %355 : f32 to vector<8x128xf32>
    %357 = arith.mulf %0, %356 : vector<8x128xf32>
    %c22_92 = arith.constant 22 : index
    %358 = memref.load %arg2[%c22_92] : memref<64xf32, #tpu.memory_space<smem>>
    %359 = vector.broadcast %358 : f32 to vector<8x128xf32>
    %360 = arith.mulf %1, %359 : vector<8x128xf32>
    %361 = arith.addf %357, %360 : vector<8x128xf32>
    %c22_93 = arith.constant 22 : index
    %362 = memref.load %arg3[%c22_93] : memref<64xf32, #tpu.memory_space<smem>>
    %363 = vector.broadcast %362 : f32 to vector<8x128xf32>
    %364 = arith.addf %361, %363 : vector<8x128xf32>
    %cst_94 = arith.constant 0.000000e+00 : f32
    %365 = vector.broadcast %cst_94 : f32 to vector<8x128xf32>
    %366 = arith.maximumf %364, %365 : vector<8x128xf32>
    %c22_95 = arith.constant 22 : index
    %367 = memref.load %arg4[%c22_95] : memref<64xf32, #tpu.memory_space<smem>>
    %368 = vector.broadcast %367 : f32 to vector<8x128xf32>
    %369 = arith.mulf %368, %366 : vector<8x128xf32>
    %370 = arith.addf %354, %369 : vector<8x128xf32>
    %c23 = arith.constant 23 : index
    %371 = memref.load %arg1[%c23] : memref<64xf32, #tpu.memory_space<smem>>
    %372 = vector.broadcast %371 : f32 to vector<8x128xf32>
    %373 = arith.mulf %0, %372 : vector<8x128xf32>
    %c23_96 = arith.constant 23 : index
    %374 = memref.load %arg2[%c23_96] : memref<64xf32, #tpu.memory_space<smem>>
    %375 = vector.broadcast %374 : f32 to vector<8x128xf32>
    %376 = arith.mulf %1, %375 : vector<8x128xf32>
    %377 = arith.addf %373, %376 : vector<8x128xf32>
    %c23_97 = arith.constant 23 : index
    %378 = memref.load %arg3[%c23_97] : memref<64xf32, #tpu.memory_space<smem>>
    %379 = vector.broadcast %378 : f32 to vector<8x128xf32>
    %380 = arith.addf %377, %379 : vector<8x128xf32>
    %cst_98 = arith.constant 0.000000e+00 : f32
    %381 = vector.broadcast %cst_98 : f32 to vector<8x128xf32>
    %382 = arith.maximumf %380, %381 : vector<8x128xf32>
    %c23_99 = arith.constant 23 : index
    %383 = memref.load %arg4[%c23_99] : memref<64xf32, #tpu.memory_space<smem>>
    %384 = vector.broadcast %383 : f32 to vector<8x128xf32>
    %385 = arith.mulf %384, %382 : vector<8x128xf32>
    %386 = arith.addf %370, %385 : vector<8x128xf32>
    %c24 = arith.constant 24 : index
    %387 = memref.load %arg1[%c24] : memref<64xf32, #tpu.memory_space<smem>>
    %388 = vector.broadcast %387 : f32 to vector<8x128xf32>
    %389 = arith.mulf %0, %388 : vector<8x128xf32>
    %c24_100 = arith.constant 24 : index
    %390 = memref.load %arg2[%c24_100] : memref<64xf32, #tpu.memory_space<smem>>
    %391 = vector.broadcast %390 : f32 to vector<8x128xf32>
    %392 = arith.mulf %1, %391 : vector<8x128xf32>
    %393 = arith.addf %389, %392 : vector<8x128xf32>
    %c24_101 = arith.constant 24 : index
    %394 = memref.load %arg3[%c24_101] : memref<64xf32, #tpu.memory_space<smem>>
    %395 = vector.broadcast %394 : f32 to vector<8x128xf32>
    %396 = arith.addf %393, %395 : vector<8x128xf32>
    %cst_102 = arith.constant 0.000000e+00 : f32
    %397 = vector.broadcast %cst_102 : f32 to vector<8x128xf32>
    %398 = arith.maximumf %396, %397 : vector<8x128xf32>
    %c24_103 = arith.constant 24 : index
    %399 = memref.load %arg4[%c24_103] : memref<64xf32, #tpu.memory_space<smem>>
    %400 = vector.broadcast %399 : f32 to vector<8x128xf32>
    %401 = arith.mulf %400, %398 : vector<8x128xf32>
    %402 = arith.addf %386, %401 : vector<8x128xf32>
    %c25 = arith.constant 25 : index
    %403 = memref.load %arg1[%c25] : memref<64xf32, #tpu.memory_space<smem>>
    %404 = vector.broadcast %403 : f32 to vector<8x128xf32>
    %405 = arith.mulf %0, %404 : vector<8x128xf32>
    %c25_104 = arith.constant 25 : index
    %406 = memref.load %arg2[%c25_104] : memref<64xf32, #tpu.memory_space<smem>>
    %407 = vector.broadcast %406 : f32 to vector<8x128xf32>
    %408 = arith.mulf %1, %407 : vector<8x128xf32>
    %409 = arith.addf %405, %408 : vector<8x128xf32>
    %c25_105 = arith.constant 25 : index
    %410 = memref.load %arg3[%c25_105] : memref<64xf32, #tpu.memory_space<smem>>
    %411 = vector.broadcast %410 : f32 to vector<8x128xf32>
    %412 = arith.addf %409, %411 : vector<8x128xf32>
    %cst_106 = arith.constant 0.000000e+00 : f32
    %413 = vector.broadcast %cst_106 : f32 to vector<8x128xf32>
    %414 = arith.maximumf %412, %413 : vector<8x128xf32>
    %c25_107 = arith.constant 25 : index
    %415 = memref.load %arg4[%c25_107] : memref<64xf32, #tpu.memory_space<smem>>
    %416 = vector.broadcast %415 : f32 to vector<8x128xf32>
    %417 = arith.mulf %416, %414 : vector<8x128xf32>
    %418 = arith.addf %402, %417 : vector<8x128xf32>
    %c26 = arith.constant 26 : index
    %419 = memref.load %arg1[%c26] : memref<64xf32, #tpu.memory_space<smem>>
    %420 = vector.broadcast %419 : f32 to vector<8x128xf32>
    %421 = arith.mulf %0, %420 : vector<8x128xf32>
    %c26_108 = arith.constant 26 : index
    %422 = memref.load %arg2[%c26_108] : memref<64xf32, #tpu.memory_space<smem>>
    %423 = vector.broadcast %422 : f32 to vector<8x128xf32>
    %424 = arith.mulf %1, %423 : vector<8x128xf32>
    %425 = arith.addf %421, %424 : vector<8x128xf32>
    %c26_109 = arith.constant 26 : index
    %426 = memref.load %arg3[%c26_109] : memref<64xf32, #tpu.memory_space<smem>>
    %427 = vector.broadcast %426 : f32 to vector<8x128xf32>
    %428 = arith.addf %425, %427 : vector<8x128xf32>
    %cst_110 = arith.constant 0.000000e+00 : f32
    %429 = vector.broadcast %cst_110 : f32 to vector<8x128xf32>
    %430 = arith.maximumf %428, %429 : vector<8x128xf32>
    %c26_111 = arith.constant 26 : index
    %431 = memref.load %arg4[%c26_111] : memref<64xf32, #tpu.memory_space<smem>>
    %432 = vector.broadcast %431 : f32 to vector<8x128xf32>
    %433 = arith.mulf %432, %430 : vector<8x128xf32>
    %434 = arith.addf %418, %433 : vector<8x128xf32>
    %c27 = arith.constant 27 : index
    %435 = memref.load %arg1[%c27] : memref<64xf32, #tpu.memory_space<smem>>
    %436 = vector.broadcast %435 : f32 to vector<8x128xf32>
    %437 = arith.mulf %0, %436 : vector<8x128xf32>
    %c27_112 = arith.constant 27 : index
    %438 = memref.load %arg2[%c27_112] : memref<64xf32, #tpu.memory_space<smem>>
    %439 = vector.broadcast %438 : f32 to vector<8x128xf32>
    %440 = arith.mulf %1, %439 : vector<8x128xf32>
    %441 = arith.addf %437, %440 : vector<8x128xf32>
    %c27_113 = arith.constant 27 : index
    %442 = memref.load %arg3[%c27_113] : memref<64xf32, #tpu.memory_space<smem>>
    %443 = vector.broadcast %442 : f32 to vector<8x128xf32>
    %444 = arith.addf %441, %443 : vector<8x128xf32>
    %cst_114 = arith.constant 0.000000e+00 : f32
    %445 = vector.broadcast %cst_114 : f32 to vector<8x128xf32>
    %446 = arith.maximumf %444, %445 : vector<8x128xf32>
    %c27_115 = arith.constant 27 : index
    %447 = memref.load %arg4[%c27_115] : memref<64xf32, #tpu.memory_space<smem>>
    %448 = vector.broadcast %447 : f32 to vector<8x128xf32>
    %449 = arith.mulf %448, %446 : vector<8x128xf32>
    %450 = arith.addf %434, %449 : vector<8x128xf32>
    %c28 = arith.constant 28 : index
    %451 = memref.load %arg1[%c28] : memref<64xf32, #tpu.memory_space<smem>>
    %452 = vector.broadcast %451 : f32 to vector<8x128xf32>
    %453 = arith.mulf %0, %452 : vector<8x128xf32>
    %c28_116 = arith.constant 28 : index
    %454 = memref.load %arg2[%c28_116] : memref<64xf32, #tpu.memory_space<smem>>
    %455 = vector.broadcast %454 : f32 to vector<8x128xf32>
    %456 = arith.mulf %1, %455 : vector<8x128xf32>
    %457 = arith.addf %453, %456 : vector<8x128xf32>
    %c28_117 = arith.constant 28 : index
    %458 = memref.load %arg3[%c28_117] : memref<64xf32, #tpu.memory_space<smem>>
    %459 = vector.broadcast %458 : f32 to vector<8x128xf32>
    %460 = arith.addf %457, %459 : vector<8x128xf32>
    %cst_118 = arith.constant 0.000000e+00 : f32
    %461 = vector.broadcast %cst_118 : f32 to vector<8x128xf32>
    %462 = arith.maximumf %460, %461 : vector<8x128xf32>
    %c28_119 = arith.constant 28 : index
    %463 = memref.load %arg4[%c28_119] : memref<64xf32, #tpu.memory_space<smem>>
    %464 = vector.broadcast %463 : f32 to vector<8x128xf32>
    %465 = arith.mulf %464, %462 : vector<8x128xf32>
    %466 = arith.addf %450, %465 : vector<8x128xf32>
    %c29 = arith.constant 29 : index
    %467 = memref.load %arg1[%c29] : memref<64xf32, #tpu.memory_space<smem>>
    %468 = vector.broadcast %467 : f32 to vector<8x128xf32>
    %469 = arith.mulf %0, %468 : vector<8x128xf32>
    %c29_120 = arith.constant 29 : index
    %470 = memref.load %arg2[%c29_120] : memref<64xf32, #tpu.memory_space<smem>>
    %471 = vector.broadcast %470 : f32 to vector<8x128xf32>
    %472 = arith.mulf %1, %471 : vector<8x128xf32>
    %473 = arith.addf %469, %472 : vector<8x128xf32>
    %c29_121 = arith.constant 29 : index
    %474 = memref.load %arg3[%c29_121] : memref<64xf32, #tpu.memory_space<smem>>
    %475 = vector.broadcast %474 : f32 to vector<8x128xf32>
    %476 = arith.addf %473, %475 : vector<8x128xf32>
    %cst_122 = arith.constant 0.000000e+00 : f32
    %477 = vector.broadcast %cst_122 : f32 to vector<8x128xf32>
    %478 = arith.maximumf %476, %477 : vector<8x128xf32>
    %c29_123 = arith.constant 29 : index
    %479 = memref.load %arg4[%c29_123] : memref<64xf32, #tpu.memory_space<smem>>
    %480 = vector.broadcast %479 : f32 to vector<8x128xf32>
    %481 = arith.mulf %480, %478 : vector<8x128xf32>
    %482 = arith.addf %466, %481 : vector<8x128xf32>
    %c30 = arith.constant 30 : index
    %483 = memref.load %arg1[%c30] : memref<64xf32, #tpu.memory_space<smem>>
    %484 = vector.broadcast %483 : f32 to vector<8x128xf32>
    %485 = arith.mulf %0, %484 : vector<8x128xf32>
    %c30_124 = arith.constant 30 : index
    %486 = memref.load %arg2[%c30_124] : memref<64xf32, #tpu.memory_space<smem>>
    %487 = vector.broadcast %486 : f32 to vector<8x128xf32>
    %488 = arith.mulf %1, %487 : vector<8x128xf32>
    %489 = arith.addf %485, %488 : vector<8x128xf32>
    %c30_125 = arith.constant 30 : index
    %490 = memref.load %arg3[%c30_125] : memref<64xf32, #tpu.memory_space<smem>>
    %491 = vector.broadcast %490 : f32 to vector<8x128xf32>
    %492 = arith.addf %489, %491 : vector<8x128xf32>
    %cst_126 = arith.constant 0.000000e+00 : f32
    %493 = vector.broadcast %cst_126 : f32 to vector<8x128xf32>
    %494 = arith.maximumf %492, %493 : vector<8x128xf32>
    %c30_127 = arith.constant 30 : index
    %495 = memref.load %arg4[%c30_127] : memref<64xf32, #tpu.memory_space<smem>>
    %496 = vector.broadcast %495 : f32 to vector<8x128xf32>
    %497 = arith.mulf %496, %494 : vector<8x128xf32>
    %498 = arith.addf %482, %497 : vector<8x128xf32>
    %c31 = arith.constant 31 : index
    %499 = memref.load %arg1[%c31] : memref<64xf32, #tpu.memory_space<smem>>
    %500 = vector.broadcast %499 : f32 to vector<8x128xf32>
    %501 = arith.mulf %0, %500 : vector<8x128xf32>
    %c31_128 = arith.constant 31 : index
    %502 = memref.load %arg2[%c31_128] : memref<64xf32, #tpu.memory_space<smem>>
    %503 = vector.broadcast %502 : f32 to vector<8x128xf32>
    %504 = arith.mulf %1, %503 : vector<8x128xf32>
    %505 = arith.addf %501, %504 : vector<8x128xf32>
    %c31_129 = arith.constant 31 : index
    %506 = memref.load %arg3[%c31_129] : memref<64xf32, #tpu.memory_space<smem>>
    %507 = vector.broadcast %506 : f32 to vector<8x128xf32>
    %508 = arith.addf %505, %507 : vector<8x128xf32>
    %cst_130 = arith.constant 0.000000e+00 : f32
    %509 = vector.broadcast %cst_130 : f32 to vector<8x128xf32>
    %510 = arith.maximumf %508, %509 : vector<8x128xf32>
    %c31_131 = arith.constant 31 : index
    %511 = memref.load %arg4[%c31_131] : memref<64xf32, #tpu.memory_space<smem>>
    %512 = vector.broadcast %511 : f32 to vector<8x128xf32>
    %513 = arith.mulf %512, %510 : vector<8x128xf32>
    %514 = arith.addf %498, %513 : vector<8x128xf32>
    %c32 = arith.constant 32 : index
    %515 = memref.load %arg1[%c32] : memref<64xf32, #tpu.memory_space<smem>>
    %516 = vector.broadcast %515 : f32 to vector<8x128xf32>
    %517 = arith.mulf %0, %516 : vector<8x128xf32>
    %c32_132 = arith.constant 32 : index
    %518 = memref.load %arg2[%c32_132] : memref<64xf32, #tpu.memory_space<smem>>
    %519 = vector.broadcast %518 : f32 to vector<8x128xf32>
    %520 = arith.mulf %1, %519 : vector<8x128xf32>
    %521 = arith.addf %517, %520 : vector<8x128xf32>
    %c32_133 = arith.constant 32 : index
    %522 = memref.load %arg3[%c32_133] : memref<64xf32, #tpu.memory_space<smem>>
    %523 = vector.broadcast %522 : f32 to vector<8x128xf32>
    %524 = arith.addf %521, %523 : vector<8x128xf32>
    %cst_134 = arith.constant 0.000000e+00 : f32
    %525 = vector.broadcast %cst_134 : f32 to vector<8x128xf32>
    %526 = arith.maximumf %524, %525 : vector<8x128xf32>
    %c32_135 = arith.constant 32 : index
    %527 = memref.load %arg4[%c32_135] : memref<64xf32, #tpu.memory_space<smem>>
    %528 = vector.broadcast %527 : f32 to vector<8x128xf32>
    %529 = arith.mulf %528, %526 : vector<8x128xf32>
    %530 = arith.addf %514, %529 : vector<8x128xf32>
    %c33 = arith.constant 33 : index
    %531 = memref.load %arg1[%c33] : memref<64xf32, #tpu.memory_space<smem>>
    %532 = vector.broadcast %531 : f32 to vector<8x128xf32>
    %533 = arith.mulf %0, %532 : vector<8x128xf32>
    %c33_136 = arith.constant 33 : index
    %534 = memref.load %arg2[%c33_136] : memref<64xf32, #tpu.memory_space<smem>>
    %535 = vector.broadcast %534 : f32 to vector<8x128xf32>
    %536 = arith.mulf %1, %535 : vector<8x128xf32>
    %537 = arith.addf %533, %536 : vector<8x128xf32>
    %c33_137 = arith.constant 33 : index
    %538 = memref.load %arg3[%c33_137] : memref<64xf32, #tpu.memory_space<smem>>
    %539 = vector.broadcast %538 : f32 to vector<8x128xf32>
    %540 = arith.addf %537, %539 : vector<8x128xf32>
    %cst_138 = arith.constant 0.000000e+00 : f32
    %541 = vector.broadcast %cst_138 : f32 to vector<8x128xf32>
    %542 = arith.maximumf %540, %541 : vector<8x128xf32>
    %c33_139 = arith.constant 33 : index
    %543 = memref.load %arg4[%c33_139] : memref<64xf32, #tpu.memory_space<smem>>
    %544 = vector.broadcast %543 : f32 to vector<8x128xf32>
    %545 = arith.mulf %544, %542 : vector<8x128xf32>
    %546 = arith.addf %530, %545 : vector<8x128xf32>
    %c34 = arith.constant 34 : index
    %547 = memref.load %arg1[%c34] : memref<64xf32, #tpu.memory_space<smem>>
    %548 = vector.broadcast %547 : f32 to vector<8x128xf32>
    %549 = arith.mulf %0, %548 : vector<8x128xf32>
    %c34_140 = arith.constant 34 : index
    %550 = memref.load %arg2[%c34_140] : memref<64xf32, #tpu.memory_space<smem>>
    %551 = vector.broadcast %550 : f32 to vector<8x128xf32>
    %552 = arith.mulf %1, %551 : vector<8x128xf32>
    %553 = arith.addf %549, %552 : vector<8x128xf32>
    %c34_141 = arith.constant 34 : index
    %554 = memref.load %arg3[%c34_141] : memref<64xf32, #tpu.memory_space<smem>>
    %555 = vector.broadcast %554 : f32 to vector<8x128xf32>
    %556 = arith.addf %553, %555 : vector<8x128xf32>
    %cst_142 = arith.constant 0.000000e+00 : f32
    %557 = vector.broadcast %cst_142 : f32 to vector<8x128xf32>
    %558 = arith.maximumf %556, %557 : vector<8x128xf32>
    %c34_143 = arith.constant 34 : index
    %559 = memref.load %arg4[%c34_143] : memref<64xf32, #tpu.memory_space<smem>>
    %560 = vector.broadcast %559 : f32 to vector<8x128xf32>
    %561 = arith.mulf %560, %558 : vector<8x128xf32>
    %562 = arith.addf %546, %561 : vector<8x128xf32>
    %c35 = arith.constant 35 : index
    %563 = memref.load %arg1[%c35] : memref<64xf32, #tpu.memory_space<smem>>
    %564 = vector.broadcast %563 : f32 to vector<8x128xf32>
    %565 = arith.mulf %0, %564 : vector<8x128xf32>
    %c35_144 = arith.constant 35 : index
    %566 = memref.load %arg2[%c35_144] : memref<64xf32, #tpu.memory_space<smem>>
    %567 = vector.broadcast %566 : f32 to vector<8x128xf32>
    %568 = arith.mulf %1, %567 : vector<8x128xf32>
    %569 = arith.addf %565, %568 : vector<8x128xf32>
    %c35_145 = arith.constant 35 : index
    %570 = memref.load %arg3[%c35_145] : memref<64xf32, #tpu.memory_space<smem>>
    %571 = vector.broadcast %570 : f32 to vector<8x128xf32>
    %572 = arith.addf %569, %571 : vector<8x128xf32>
    %cst_146 = arith.constant 0.000000e+00 : f32
    %573 = vector.broadcast %cst_146 : f32 to vector<8x128xf32>
    %574 = arith.maximumf %572, %573 : vector<8x128xf32>
    %c35_147 = arith.constant 35 : index
    %575 = memref.load %arg4[%c35_147] : memref<64xf32, #tpu.memory_space<smem>>
    %576 = vector.broadcast %575 : f32 to vector<8x128xf32>
    %577 = arith.mulf %576, %574 : vector<8x128xf32>
    %578 = arith.addf %562, %577 : vector<8x128xf32>
    %c36 = arith.constant 36 : index
    %579 = memref.load %arg1[%c36] : memref<64xf32, #tpu.memory_space<smem>>
    %580 = vector.broadcast %579 : f32 to vector<8x128xf32>
    %581 = arith.mulf %0, %580 : vector<8x128xf32>
    %c36_148 = arith.constant 36 : index
    %582 = memref.load %arg2[%c36_148] : memref<64xf32, #tpu.memory_space<smem>>
    %583 = vector.broadcast %582 : f32 to vector<8x128xf32>
    %584 = arith.mulf %1, %583 : vector<8x128xf32>
    %585 = arith.addf %581, %584 : vector<8x128xf32>
    %c36_149 = arith.constant 36 : index
    %586 = memref.load %arg3[%c36_149] : memref<64xf32, #tpu.memory_space<smem>>
    %587 = vector.broadcast %586 : f32 to vector<8x128xf32>
    %588 = arith.addf %585, %587 : vector<8x128xf32>
    %cst_150 = arith.constant 0.000000e+00 : f32
    %589 = vector.broadcast %cst_150 : f32 to vector<8x128xf32>
    %590 = arith.maximumf %588, %589 : vector<8x128xf32>
    %c36_151 = arith.constant 36 : index
    %591 = memref.load %arg4[%c36_151] : memref<64xf32, #tpu.memory_space<smem>>
    %592 = vector.broadcast %591 : f32 to vector<8x128xf32>
    %593 = arith.mulf %592, %590 : vector<8x128xf32>
    %594 = arith.addf %578, %593 : vector<8x128xf32>
    %c37 = arith.constant 37 : index
    %595 = memref.load %arg1[%c37] : memref<64xf32, #tpu.memory_space<smem>>
    %596 = vector.broadcast %595 : f32 to vector<8x128xf32>
    %597 = arith.mulf %0, %596 : vector<8x128xf32>
    %c37_152 = arith.constant 37 : index
    %598 = memref.load %arg2[%c37_152] : memref<64xf32, #tpu.memory_space<smem>>
    %599 = vector.broadcast %598 : f32 to vector<8x128xf32>
    %600 = arith.mulf %1, %599 : vector<8x128xf32>
    %601 = arith.addf %597, %600 : vector<8x128xf32>
    %c37_153 = arith.constant 37 : index
    %602 = memref.load %arg3[%c37_153] : memref<64xf32, #tpu.memory_space<smem>>
    %603 = vector.broadcast %602 : f32 to vector<8x128xf32>
    %604 = arith.addf %601, %603 : vector<8x128xf32>
    %cst_154 = arith.constant 0.000000e+00 : f32
    %605 = vector.broadcast %cst_154 : f32 to vector<8x128xf32>
    %606 = arith.maximumf %604, %605 : vector<8x128xf32>
    %c37_155 = arith.constant 37 : index
    %607 = memref.load %arg4[%c37_155] : memref<64xf32, #tpu.memory_space<smem>>
    %608 = vector.broadcast %607 : f32 to vector<8x128xf32>
    %609 = arith.mulf %608, %606 : vector<8x128xf32>
    %610 = arith.addf %594, %609 : vector<8x128xf32>
    %c38 = arith.constant 38 : index
    %611 = memref.load %arg1[%c38] : memref<64xf32, #tpu.memory_space<smem>>
    %612 = vector.broadcast %611 : f32 to vector<8x128xf32>
    %613 = arith.mulf %0, %612 : vector<8x128xf32>
    %c38_156 = arith.constant 38 : index
    %614 = memref.load %arg2[%c38_156] : memref<64xf32, #tpu.memory_space<smem>>
    %615 = vector.broadcast %614 : f32 to vector<8x128xf32>
    %616 = arith.mulf %1, %615 : vector<8x128xf32>
    %617 = arith.addf %613, %616 : vector<8x128xf32>
    %c38_157 = arith.constant 38 : index
    %618 = memref.load %arg3[%c38_157] : memref<64xf32, #tpu.memory_space<smem>>
    %619 = vector.broadcast %618 : f32 to vector<8x128xf32>
    %620 = arith.addf %617, %619 : vector<8x128xf32>
    %cst_158 = arith.constant 0.000000e+00 : f32
    %621 = vector.broadcast %cst_158 : f32 to vector<8x128xf32>
    %622 = arith.maximumf %620, %621 : vector<8x128xf32>
    %c38_159 = arith.constant 38 : index
    %623 = memref.load %arg4[%c38_159] : memref<64xf32, #tpu.memory_space<smem>>
    %624 = vector.broadcast %623 : f32 to vector<8x128xf32>
    %625 = arith.mulf %624, %622 : vector<8x128xf32>
    %626 = arith.addf %610, %625 : vector<8x128xf32>
    %c39 = arith.constant 39 : index
    %627 = memref.load %arg1[%c39] : memref<64xf32, #tpu.memory_space<smem>>
    %628 = vector.broadcast %627 : f32 to vector<8x128xf32>
    %629 = arith.mulf %0, %628 : vector<8x128xf32>
    %c39_160 = arith.constant 39 : index
    %630 = memref.load %arg2[%c39_160] : memref<64xf32, #tpu.memory_space<smem>>
    %631 = vector.broadcast %630 : f32 to vector<8x128xf32>
    %632 = arith.mulf %1, %631 : vector<8x128xf32>
    %633 = arith.addf %629, %632 : vector<8x128xf32>
    %c39_161 = arith.constant 39 : index
    %634 = memref.load %arg3[%c39_161] : memref<64xf32, #tpu.memory_space<smem>>
    %635 = vector.broadcast %634 : f32 to vector<8x128xf32>
    %636 = arith.addf %633, %635 : vector<8x128xf32>
    %cst_162 = arith.constant 0.000000e+00 : f32
    %637 = vector.broadcast %cst_162 : f32 to vector<8x128xf32>
    %638 = arith.maximumf %636, %637 : vector<8x128xf32>
    %c39_163 = arith.constant 39 : index
    %639 = memref.load %arg4[%c39_163] : memref<64xf32, #tpu.memory_space<smem>>
    %640 = vector.broadcast %639 : f32 to vector<8x128xf32>
    %641 = arith.mulf %640, %638 : vector<8x128xf32>
    %642 = arith.addf %626, %641 : vector<8x128xf32>
    %c40 = arith.constant 40 : index
    %643 = memref.load %arg1[%c40] : memref<64xf32, #tpu.memory_space<smem>>
    %644 = vector.broadcast %643 : f32 to vector<8x128xf32>
    %645 = arith.mulf %0, %644 : vector<8x128xf32>
    %c40_164 = arith.constant 40 : index
    %646 = memref.load %arg2[%c40_164] : memref<64xf32, #tpu.memory_space<smem>>
    %647 = vector.broadcast %646 : f32 to vector<8x128xf32>
    %648 = arith.mulf %1, %647 : vector<8x128xf32>
    %649 = arith.addf %645, %648 : vector<8x128xf32>
    %c40_165 = arith.constant 40 : index
    %650 = memref.load %arg3[%c40_165] : memref<64xf32, #tpu.memory_space<smem>>
    %651 = vector.broadcast %650 : f32 to vector<8x128xf32>
    %652 = arith.addf %649, %651 : vector<8x128xf32>
    %cst_166 = arith.constant 0.000000e+00 : f32
    %653 = vector.broadcast %cst_166 : f32 to vector<8x128xf32>
    %654 = arith.maximumf %652, %653 : vector<8x128xf32>
    %c40_167 = arith.constant 40 : index
    %655 = memref.load %arg4[%c40_167] : memref<64xf32, #tpu.memory_space<smem>>
    %656 = vector.broadcast %655 : f32 to vector<8x128xf32>
    %657 = arith.mulf %656, %654 : vector<8x128xf32>
    %658 = arith.addf %642, %657 : vector<8x128xf32>
    %c41 = arith.constant 41 : index
    %659 = memref.load %arg1[%c41] : memref<64xf32, #tpu.memory_space<smem>>
    %660 = vector.broadcast %659 : f32 to vector<8x128xf32>
    %661 = arith.mulf %0, %660 : vector<8x128xf32>
    %c41_168 = arith.constant 41 : index
    %662 = memref.load %arg2[%c41_168] : memref<64xf32, #tpu.memory_space<smem>>
    %663 = vector.broadcast %662 : f32 to vector<8x128xf32>
    %664 = arith.mulf %1, %663 : vector<8x128xf32>
    %665 = arith.addf %661, %664 : vector<8x128xf32>
    %c41_169 = arith.constant 41 : index
    %666 = memref.load %arg3[%c41_169] : memref<64xf32, #tpu.memory_space<smem>>
    %667 = vector.broadcast %666 : f32 to vector<8x128xf32>
    %668 = arith.addf %665, %667 : vector<8x128xf32>
    %cst_170 = arith.constant 0.000000e+00 : f32
    %669 = vector.broadcast %cst_170 : f32 to vector<8x128xf32>
    %670 = arith.maximumf %668, %669 : vector<8x128xf32>
    %c41_171 = arith.constant 41 : index
    %671 = memref.load %arg4[%c41_171] : memref<64xf32, #tpu.memory_space<smem>>
    %672 = vector.broadcast %671 : f32 to vector<8x128xf32>
    %673 = arith.mulf %672, %670 : vector<8x128xf32>
    %674 = arith.addf %658, %673 : vector<8x128xf32>
    %c42 = arith.constant 42 : index
    %675 = memref.load %arg1[%c42] : memref<64xf32, #tpu.memory_space<smem>>
    %676 = vector.broadcast %675 : f32 to vector<8x128xf32>
    %677 = arith.mulf %0, %676 : vector<8x128xf32>
    %c42_172 = arith.constant 42 : index
    %678 = memref.load %arg2[%c42_172] : memref<64xf32, #tpu.memory_space<smem>>
    %679 = vector.broadcast %678 : f32 to vector<8x128xf32>
    %680 = arith.mulf %1, %679 : vector<8x128xf32>
    %681 = arith.addf %677, %680 : vector<8x128xf32>
    %c42_173 = arith.constant 42 : index
    %682 = memref.load %arg3[%c42_173] : memref<64xf32, #tpu.memory_space<smem>>
    %683 = vector.broadcast %682 : f32 to vector<8x128xf32>
    %684 = arith.addf %681, %683 : vector<8x128xf32>
    %cst_174 = arith.constant 0.000000e+00 : f32
    %685 = vector.broadcast %cst_174 : f32 to vector<8x128xf32>
    %686 = arith.maximumf %684, %685 : vector<8x128xf32>
    %c42_175 = arith.constant 42 : index
    %687 = memref.load %arg4[%c42_175] : memref<64xf32, #tpu.memory_space<smem>>
    %688 = vector.broadcast %687 : f32 to vector<8x128xf32>
    %689 = arith.mulf %688, %686 : vector<8x128xf32>
    %690 = arith.addf %674, %689 : vector<8x128xf32>
    %c43 = arith.constant 43 : index
    %691 = memref.load %arg1[%c43] : memref<64xf32, #tpu.memory_space<smem>>
    %692 = vector.broadcast %691 : f32 to vector<8x128xf32>
    %693 = arith.mulf %0, %692 : vector<8x128xf32>
    %c43_176 = arith.constant 43 : index
    %694 = memref.load %arg2[%c43_176] : memref<64xf32, #tpu.memory_space<smem>>
    %695 = vector.broadcast %694 : f32 to vector<8x128xf32>
    %696 = arith.mulf %1, %695 : vector<8x128xf32>
    %697 = arith.addf %693, %696 : vector<8x128xf32>
    %c43_177 = arith.constant 43 : index
    %698 = memref.load %arg3[%c43_177] : memref<64xf32, #tpu.memory_space<smem>>
    %699 = vector.broadcast %698 : f32 to vector<8x128xf32>
    %700 = arith.addf %697, %699 : vector<8x128xf32>
    %cst_178 = arith.constant 0.000000e+00 : f32
    %701 = vector.broadcast %cst_178 : f32 to vector<8x128xf32>
    %702 = arith.maximumf %700, %701 : vector<8x128xf32>
    %c43_179 = arith.constant 43 : index
    %703 = memref.load %arg4[%c43_179] : memref<64xf32, #tpu.memory_space<smem>>
    %704 = vector.broadcast %703 : f32 to vector<8x128xf32>
    %705 = arith.mulf %704, %702 : vector<8x128xf32>
    %706 = arith.addf %690, %705 : vector<8x128xf32>
    %c44 = arith.constant 44 : index
    %707 = memref.load %arg1[%c44] : memref<64xf32, #tpu.memory_space<smem>>
    %708 = vector.broadcast %707 : f32 to vector<8x128xf32>
    %709 = arith.mulf %0, %708 : vector<8x128xf32>
    %c44_180 = arith.constant 44 : index
    %710 = memref.load %arg2[%c44_180] : memref<64xf32, #tpu.memory_space<smem>>
    %711 = vector.broadcast %710 : f32 to vector<8x128xf32>
    %712 = arith.mulf %1, %711 : vector<8x128xf32>
    %713 = arith.addf %709, %712 : vector<8x128xf32>
    %c44_181 = arith.constant 44 : index
    %714 = memref.load %arg3[%c44_181] : memref<64xf32, #tpu.memory_space<smem>>
    %715 = vector.broadcast %714 : f32 to vector<8x128xf32>
    %716 = arith.addf %713, %715 : vector<8x128xf32>
    %cst_182 = arith.constant 0.000000e+00 : f32
    %717 = vector.broadcast %cst_182 : f32 to vector<8x128xf32>
    %718 = arith.maximumf %716, %717 : vector<8x128xf32>
    %c44_183 = arith.constant 44 : index
    %719 = memref.load %arg4[%c44_183] : memref<64xf32, #tpu.memory_space<smem>>
    %720 = vector.broadcast %719 : f32 to vector<8x128xf32>
    %721 = arith.mulf %720, %718 : vector<8x128xf32>
    %722 = arith.addf %706, %721 : vector<8x128xf32>
    %c45 = arith.constant 45 : index
    %723 = memref.load %arg1[%c45] : memref<64xf32, #tpu.memory_space<smem>>
    %724 = vector.broadcast %723 : f32 to vector<8x128xf32>
    %725 = arith.mulf %0, %724 : vector<8x128xf32>
    %c45_184 = arith.constant 45 : index
    %726 = memref.load %arg2[%c45_184] : memref<64xf32, #tpu.memory_space<smem>>
    %727 = vector.broadcast %726 : f32 to vector<8x128xf32>
    %728 = arith.mulf %1, %727 : vector<8x128xf32>
    %729 = arith.addf %725, %728 : vector<8x128xf32>
    %c45_185 = arith.constant 45 : index
    %730 = memref.load %arg3[%c45_185] : memref<64xf32, #tpu.memory_space<smem>>
    %731 = vector.broadcast %730 : f32 to vector<8x128xf32>
    %732 = arith.addf %729, %731 : vector<8x128xf32>
    %cst_186 = arith.constant 0.000000e+00 : f32
    %733 = vector.broadcast %cst_186 : f32 to vector<8x128xf32>
    %734 = arith.maximumf %732, %733 : vector<8x128xf32>
    %c45_187 = arith.constant 45 : index
    %735 = memref.load %arg4[%c45_187] : memref<64xf32, #tpu.memory_space<smem>>
    %736 = vector.broadcast %735 : f32 to vector<8x128xf32>
    %737 = arith.mulf %736, %734 : vector<8x128xf32>
    %738 = arith.addf %722, %737 : vector<8x128xf32>
    %c46 = arith.constant 46 : index
    %739 = memref.load %arg1[%c46] : memref<64xf32, #tpu.memory_space<smem>>
    %740 = vector.broadcast %739 : f32 to vector<8x128xf32>
    %741 = arith.mulf %0, %740 : vector<8x128xf32>
    %c46_188 = arith.constant 46 : index
    %742 = memref.load %arg2[%c46_188] : memref<64xf32, #tpu.memory_space<smem>>
    %743 = vector.broadcast %742 : f32 to vector<8x128xf32>
    %744 = arith.mulf %1, %743 : vector<8x128xf32>
    %745 = arith.addf %741, %744 : vector<8x128xf32>
    %c46_189 = arith.constant 46 : index
    %746 = memref.load %arg3[%c46_189] : memref<64xf32, #tpu.memory_space<smem>>
    %747 = vector.broadcast %746 : f32 to vector<8x128xf32>
    %748 = arith.addf %745, %747 : vector<8x128xf32>
    %cst_190 = arith.constant 0.000000e+00 : f32
    %749 = vector.broadcast %cst_190 : f32 to vector<8x128xf32>
    %750 = arith.maximumf %748, %749 : vector<8x128xf32>
    %c46_191 = arith.constant 46 : index
    %751 = memref.load %arg4[%c46_191] : memref<64xf32, #tpu.memory_space<smem>>
    %752 = vector.broadcast %751 : f32 to vector<8x128xf32>
    %753 = arith.mulf %752, %750 : vector<8x128xf32>
    %754 = arith.addf %738, %753 : vector<8x128xf32>
    %c47 = arith.constant 47 : index
    %755 = memref.load %arg1[%c47] : memref<64xf32, #tpu.memory_space<smem>>
    %756 = vector.broadcast %755 : f32 to vector<8x128xf32>
    %757 = arith.mulf %0, %756 : vector<8x128xf32>
    %c47_192 = arith.constant 47 : index
    %758 = memref.load %arg2[%c47_192] : memref<64xf32, #tpu.memory_space<smem>>
    %759 = vector.broadcast %758 : f32 to vector<8x128xf32>
    %760 = arith.mulf %1, %759 : vector<8x128xf32>
    %761 = arith.addf %757, %760 : vector<8x128xf32>
    %c47_193 = arith.constant 47 : index
    %762 = memref.load %arg3[%c47_193] : memref<64xf32, #tpu.memory_space<smem>>
    %763 = vector.broadcast %762 : f32 to vector<8x128xf32>
    %764 = arith.addf %761, %763 : vector<8x128xf32>
    %cst_194 = arith.constant 0.000000e+00 : f32
    %765 = vector.broadcast %cst_194 : f32 to vector<8x128xf32>
    %766 = arith.maximumf %764, %765 : vector<8x128xf32>
    %c47_195 = arith.constant 47 : index
    %767 = memref.load %arg4[%c47_195] : memref<64xf32, #tpu.memory_space<smem>>
    %768 = vector.broadcast %767 : f32 to vector<8x128xf32>
    %769 = arith.mulf %768, %766 : vector<8x128xf32>
    %770 = arith.addf %754, %769 : vector<8x128xf32>
    %c48 = arith.constant 48 : index
    %771 = memref.load %arg1[%c48] : memref<64xf32, #tpu.memory_space<smem>>
    %772 = vector.broadcast %771 : f32 to vector<8x128xf32>
    %773 = arith.mulf %0, %772 : vector<8x128xf32>
    %c48_196 = arith.constant 48 : index
    %774 = memref.load %arg2[%c48_196] : memref<64xf32, #tpu.memory_space<smem>>
    %775 = vector.broadcast %774 : f32 to vector<8x128xf32>
    %776 = arith.mulf %1, %775 : vector<8x128xf32>
    %777 = arith.addf %773, %776 : vector<8x128xf32>
    %c48_197 = arith.constant 48 : index
    %778 = memref.load %arg3[%c48_197] : memref<64xf32, #tpu.memory_space<smem>>
    %779 = vector.broadcast %778 : f32 to vector<8x128xf32>
    %780 = arith.addf %777, %779 : vector<8x128xf32>
    %cst_198 = arith.constant 0.000000e+00 : f32
    %781 = vector.broadcast %cst_198 : f32 to vector<8x128xf32>
    %782 = arith.maximumf %780, %781 : vector<8x128xf32>
    %c48_199 = arith.constant 48 : index
    %783 = memref.load %arg4[%c48_199] : memref<64xf32, #tpu.memory_space<smem>>
    %784 = vector.broadcast %783 : f32 to vector<8x128xf32>
    %785 = arith.mulf %784, %782 : vector<8x128xf32>
    %786 = arith.addf %770, %785 : vector<8x128xf32>
    %c49 = arith.constant 49 : index
    %787 = memref.load %arg1[%c49] : memref<64xf32, #tpu.memory_space<smem>>
    %788 = vector.broadcast %787 : f32 to vector<8x128xf32>
    %789 = arith.mulf %0, %788 : vector<8x128xf32>
    %c49_200 = arith.constant 49 : index
    %790 = memref.load %arg2[%c49_200] : memref<64xf32, #tpu.memory_space<smem>>
    %791 = vector.broadcast %790 : f32 to vector<8x128xf32>
    %792 = arith.mulf %1, %791 : vector<8x128xf32>
    %793 = arith.addf %789, %792 : vector<8x128xf32>
    %c49_201 = arith.constant 49 : index
    %794 = memref.load %arg3[%c49_201] : memref<64xf32, #tpu.memory_space<smem>>
    %795 = vector.broadcast %794 : f32 to vector<8x128xf32>
    %796 = arith.addf %793, %795 : vector<8x128xf32>
    %cst_202 = arith.constant 0.000000e+00 : f32
    %797 = vector.broadcast %cst_202 : f32 to vector<8x128xf32>
    %798 = arith.maximumf %796, %797 : vector<8x128xf32>
    %c49_203 = arith.constant 49 : index
    %799 = memref.load %arg4[%c49_203] : memref<64xf32, #tpu.memory_space<smem>>
    %800 = vector.broadcast %799 : f32 to vector<8x128xf32>
    %801 = arith.mulf %800, %798 : vector<8x128xf32>
    %802 = arith.addf %786, %801 : vector<8x128xf32>
    %c50 = arith.constant 50 : index
    %803 = memref.load %arg1[%c50] : memref<64xf32, #tpu.memory_space<smem>>
    %804 = vector.broadcast %803 : f32 to vector<8x128xf32>
    %805 = arith.mulf %0, %804 : vector<8x128xf32>
    %c50_204 = arith.constant 50 : index
    %806 = memref.load %arg2[%c50_204] : memref<64xf32, #tpu.memory_space<smem>>
    %807 = vector.broadcast %806 : f32 to vector<8x128xf32>
    %808 = arith.mulf %1, %807 : vector<8x128xf32>
    %809 = arith.addf %805, %808 : vector<8x128xf32>
    %c50_205 = arith.constant 50 : index
    %810 = memref.load %arg3[%c50_205] : memref<64xf32, #tpu.memory_space<smem>>
    %811 = vector.broadcast %810 : f32 to vector<8x128xf32>
    %812 = arith.addf %809, %811 : vector<8x128xf32>
    %cst_206 = arith.constant 0.000000e+00 : f32
    %813 = vector.broadcast %cst_206 : f32 to vector<8x128xf32>
    %814 = arith.maximumf %812, %813 : vector<8x128xf32>
    %c50_207 = arith.constant 50 : index
    %815 = memref.load %arg4[%c50_207] : memref<64xf32, #tpu.memory_space<smem>>
    %816 = vector.broadcast %815 : f32 to vector<8x128xf32>
    %817 = arith.mulf %816, %814 : vector<8x128xf32>
    %818 = arith.addf %802, %817 : vector<8x128xf32>
    %c51 = arith.constant 51 : index
    %819 = memref.load %arg1[%c51] : memref<64xf32, #tpu.memory_space<smem>>
    %820 = vector.broadcast %819 : f32 to vector<8x128xf32>
    %821 = arith.mulf %0, %820 : vector<8x128xf32>
    %c51_208 = arith.constant 51 : index
    %822 = memref.load %arg2[%c51_208] : memref<64xf32, #tpu.memory_space<smem>>
    %823 = vector.broadcast %822 : f32 to vector<8x128xf32>
    %824 = arith.mulf %1, %823 : vector<8x128xf32>
    %825 = arith.addf %821, %824 : vector<8x128xf32>
    %c51_209 = arith.constant 51 : index
    %826 = memref.load %arg3[%c51_209] : memref<64xf32, #tpu.memory_space<smem>>
    %827 = vector.broadcast %826 : f32 to vector<8x128xf32>
    %828 = arith.addf %825, %827 : vector<8x128xf32>
    %cst_210 = arith.constant 0.000000e+00 : f32
    %829 = vector.broadcast %cst_210 : f32 to vector<8x128xf32>
    %830 = arith.maximumf %828, %829 : vector<8x128xf32>
    %c51_211 = arith.constant 51 : index
    %831 = memref.load %arg4[%c51_211] : memref<64xf32, #tpu.memory_space<smem>>
    %832 = vector.broadcast %831 : f32 to vector<8x128xf32>
    %833 = arith.mulf %832, %830 : vector<8x128xf32>
    %834 = arith.addf %818, %833 : vector<8x128xf32>
    %c52 = arith.constant 52 : index
    %835 = memref.load %arg1[%c52] : memref<64xf32, #tpu.memory_space<smem>>
    %836 = vector.broadcast %835 : f32 to vector<8x128xf32>
    %837 = arith.mulf %0, %836 : vector<8x128xf32>
    %c52_212 = arith.constant 52 : index
    %838 = memref.load %arg2[%c52_212] : memref<64xf32, #tpu.memory_space<smem>>
    %839 = vector.broadcast %838 : f32 to vector<8x128xf32>
    %840 = arith.mulf %1, %839 : vector<8x128xf32>
    %841 = arith.addf %837, %840 : vector<8x128xf32>
    %c52_213 = arith.constant 52 : index
    %842 = memref.load %arg3[%c52_213] : memref<64xf32, #tpu.memory_space<smem>>
    %843 = vector.broadcast %842 : f32 to vector<8x128xf32>
    %844 = arith.addf %841, %843 : vector<8x128xf32>
    %cst_214 = arith.constant 0.000000e+00 : f32
    %845 = vector.broadcast %cst_214 : f32 to vector<8x128xf32>
    %846 = arith.maximumf %844, %845 : vector<8x128xf32>
    %c52_215 = arith.constant 52 : index
    %847 = memref.load %arg4[%c52_215] : memref<64xf32, #tpu.memory_space<smem>>
    %848 = vector.broadcast %847 : f32 to vector<8x128xf32>
    %849 = arith.mulf %848, %846 : vector<8x128xf32>
    %850 = arith.addf %834, %849 : vector<8x128xf32>
    %c53 = arith.constant 53 : index
    %851 = memref.load %arg1[%c53] : memref<64xf32, #tpu.memory_space<smem>>
    %852 = vector.broadcast %851 : f32 to vector<8x128xf32>
    %853 = arith.mulf %0, %852 : vector<8x128xf32>
    %c53_216 = arith.constant 53 : index
    %854 = memref.load %arg2[%c53_216] : memref<64xf32, #tpu.memory_space<smem>>
    %855 = vector.broadcast %854 : f32 to vector<8x128xf32>
    %856 = arith.mulf %1, %855 : vector<8x128xf32>
    %857 = arith.addf %853, %856 : vector<8x128xf32>
    %c53_217 = arith.constant 53 : index
    %858 = memref.load %arg3[%c53_217] : memref<64xf32, #tpu.memory_space<smem>>
    %859 = vector.broadcast %858 : f32 to vector<8x128xf32>
    %860 = arith.addf %857, %859 : vector<8x128xf32>
    %cst_218 = arith.constant 0.000000e+00 : f32
    %861 = vector.broadcast %cst_218 : f32 to vector<8x128xf32>
    %862 = arith.maximumf %860, %861 : vector<8x128xf32>
    %c53_219 = arith.constant 53 : index
    %863 = memref.load %arg4[%c53_219] : memref<64xf32, #tpu.memory_space<smem>>
    %864 = vector.broadcast %863 : f32 to vector<8x128xf32>
    %865 = arith.mulf %864, %862 : vector<8x128xf32>
    %866 = arith.addf %850, %865 : vector<8x128xf32>
    %c54 = arith.constant 54 : index
    %867 = memref.load %arg1[%c54] : memref<64xf32, #tpu.memory_space<smem>>
    %868 = vector.broadcast %867 : f32 to vector<8x128xf32>
    %869 = arith.mulf %0, %868 : vector<8x128xf32>
    %c54_220 = arith.constant 54 : index
    %870 = memref.load %arg2[%c54_220] : memref<64xf32, #tpu.memory_space<smem>>
    %871 = vector.broadcast %870 : f32 to vector<8x128xf32>
    %872 = arith.mulf %1, %871 : vector<8x128xf32>
    %873 = arith.addf %869, %872 : vector<8x128xf32>
    %c54_221 = arith.constant 54 : index
    %874 = memref.load %arg3[%c54_221] : memref<64xf32, #tpu.memory_space<smem>>
    %875 = vector.broadcast %874 : f32 to vector<8x128xf32>
    %876 = arith.addf %873, %875 : vector<8x128xf32>
    %cst_222 = arith.constant 0.000000e+00 : f32
    %877 = vector.broadcast %cst_222 : f32 to vector<8x128xf32>
    %878 = arith.maximumf %876, %877 : vector<8x128xf32>
    %c54_223 = arith.constant 54 : index
    %879 = memref.load %arg4[%c54_223] : memref<64xf32, #tpu.memory_space<smem>>
    %880 = vector.broadcast %879 : f32 to vector<8x128xf32>
    %881 = arith.mulf %880, %878 : vector<8x128xf32>
    %882 = arith.addf %866, %881 : vector<8x128xf32>
    %c55 = arith.constant 55 : index
    %883 = memref.load %arg1[%c55] : memref<64xf32, #tpu.memory_space<smem>>
    %884 = vector.broadcast %883 : f32 to vector<8x128xf32>
    %885 = arith.mulf %0, %884 : vector<8x128xf32>
    %c55_224 = arith.constant 55 : index
    %886 = memref.load %arg2[%c55_224] : memref<64xf32, #tpu.memory_space<smem>>
    %887 = vector.broadcast %886 : f32 to vector<8x128xf32>
    %888 = arith.mulf %1, %887 : vector<8x128xf32>
    %889 = arith.addf %885, %888 : vector<8x128xf32>
    %c55_225 = arith.constant 55 : index
    %890 = memref.load %arg3[%c55_225] : memref<64xf32, #tpu.memory_space<smem>>
    %891 = vector.broadcast %890 : f32 to vector<8x128xf32>
    %892 = arith.addf %889, %891 : vector<8x128xf32>
    %cst_226 = arith.constant 0.000000e+00 : f32
    %893 = vector.broadcast %cst_226 : f32 to vector<8x128xf32>
    %894 = arith.maximumf %892, %893 : vector<8x128xf32>
    %c55_227 = arith.constant 55 : index
    %895 = memref.load %arg4[%c55_227] : memref<64xf32, #tpu.memory_space<smem>>
    %896 = vector.broadcast %895 : f32 to vector<8x128xf32>
    %897 = arith.mulf %896, %894 : vector<8x128xf32>
    %898 = arith.addf %882, %897 : vector<8x128xf32>
    %c56 = arith.constant 56 : index
    %899 = memref.load %arg1[%c56] : memref<64xf32, #tpu.memory_space<smem>>
    %900 = vector.broadcast %899 : f32 to vector<8x128xf32>
    %901 = arith.mulf %0, %900 : vector<8x128xf32>
    %c56_228 = arith.constant 56 : index
    %902 = memref.load %arg2[%c56_228] : memref<64xf32, #tpu.memory_space<smem>>
    %903 = vector.broadcast %902 : f32 to vector<8x128xf32>
    %904 = arith.mulf %1, %903 : vector<8x128xf32>
    %905 = arith.addf %901, %904 : vector<8x128xf32>
    %c56_229 = arith.constant 56 : index
    %906 = memref.load %arg3[%c56_229] : memref<64xf32, #tpu.memory_space<smem>>
    %907 = vector.broadcast %906 : f32 to vector<8x128xf32>
    %908 = arith.addf %905, %907 : vector<8x128xf32>
    %cst_230 = arith.constant 0.000000e+00 : f32
    %909 = vector.broadcast %cst_230 : f32 to vector<8x128xf32>
    %910 = arith.maximumf %908, %909 : vector<8x128xf32>
    %c56_231 = arith.constant 56 : index
    %911 = memref.load %arg4[%c56_231] : memref<64xf32, #tpu.memory_space<smem>>
    %912 = vector.broadcast %911 : f32 to vector<8x128xf32>
    %913 = arith.mulf %912, %910 : vector<8x128xf32>
    %914 = arith.addf %898, %913 : vector<8x128xf32>
    %c57 = arith.constant 57 : index
    %915 = memref.load %arg1[%c57] : memref<64xf32, #tpu.memory_space<smem>>
    %916 = vector.broadcast %915 : f32 to vector<8x128xf32>
    %917 = arith.mulf %0, %916 : vector<8x128xf32>
    %c57_232 = arith.constant 57 : index
    %918 = memref.load %arg2[%c57_232] : memref<64xf32, #tpu.memory_space<smem>>
    %919 = vector.broadcast %918 : f32 to vector<8x128xf32>
    %920 = arith.mulf %1, %919 : vector<8x128xf32>
    %921 = arith.addf %917, %920 : vector<8x128xf32>
    %c57_233 = arith.constant 57 : index
    %922 = memref.load %arg3[%c57_233] : memref<64xf32, #tpu.memory_space<smem>>
    %923 = vector.broadcast %922 : f32 to vector<8x128xf32>
    %924 = arith.addf %921, %923 : vector<8x128xf32>
    %cst_234 = arith.constant 0.000000e+00 : f32
    %925 = vector.broadcast %cst_234 : f32 to vector<8x128xf32>
    %926 = arith.maximumf %924, %925 : vector<8x128xf32>
    %c57_235 = arith.constant 57 : index
    %927 = memref.load %arg4[%c57_235] : memref<64xf32, #tpu.memory_space<smem>>
    %928 = vector.broadcast %927 : f32 to vector<8x128xf32>
    %929 = arith.mulf %928, %926 : vector<8x128xf32>
    %930 = arith.addf %914, %929 : vector<8x128xf32>
    %c58 = arith.constant 58 : index
    %931 = memref.load %arg1[%c58] : memref<64xf32, #tpu.memory_space<smem>>
    %932 = vector.broadcast %931 : f32 to vector<8x128xf32>
    %933 = arith.mulf %0, %932 : vector<8x128xf32>
    %c58_236 = arith.constant 58 : index
    %934 = memref.load %arg2[%c58_236] : memref<64xf32, #tpu.memory_space<smem>>
    %935 = vector.broadcast %934 : f32 to vector<8x128xf32>
    %936 = arith.mulf %1, %935 : vector<8x128xf32>
    %937 = arith.addf %933, %936 : vector<8x128xf32>
    %c58_237 = arith.constant 58 : index
    %938 = memref.load %arg3[%c58_237] : memref<64xf32, #tpu.memory_space<smem>>
    %939 = vector.broadcast %938 : f32 to vector<8x128xf32>
    %940 = arith.addf %937, %939 : vector<8x128xf32>
    %cst_238 = arith.constant 0.000000e+00 : f32
    %941 = vector.broadcast %cst_238 : f32 to vector<8x128xf32>
    %942 = arith.maximumf %940, %941 : vector<8x128xf32>
    %c58_239 = arith.constant 58 : index
    %943 = memref.load %arg4[%c58_239] : memref<64xf32, #tpu.memory_space<smem>>
    %944 = vector.broadcast %943 : f32 to vector<8x128xf32>
    %945 = arith.mulf %944, %942 : vector<8x128xf32>
    %946 = arith.addf %930, %945 : vector<8x128xf32>
    %c59 = arith.constant 59 : index
    %947 = memref.load %arg1[%c59] : memref<64xf32, #tpu.memory_space<smem>>
    %948 = vector.broadcast %947 : f32 to vector<8x128xf32>
    %949 = arith.mulf %0, %948 : vector<8x128xf32>
    %c59_240 = arith.constant 59 : index
    %950 = memref.load %arg2[%c59_240] : memref<64xf32, #tpu.memory_space<smem>>
    %951 = vector.broadcast %950 : f32 to vector<8x128xf32>
    %952 = arith.mulf %1, %951 : vector<8x128xf32>
    %953 = arith.addf %949, %952 : vector<8x128xf32>
    %c59_241 = arith.constant 59 : index
    %954 = memref.load %arg3[%c59_241] : memref<64xf32, #tpu.memory_space<smem>>
    %955 = vector.broadcast %954 : f32 to vector<8x128xf32>
    %956 = arith.addf %953, %955 : vector<8x128xf32>
    %cst_242 = arith.constant 0.000000e+00 : f32
    %957 = vector.broadcast %cst_242 : f32 to vector<8x128xf32>
    %958 = arith.maximumf %956, %957 : vector<8x128xf32>
    %c59_243 = arith.constant 59 : index
    %959 = memref.load %arg4[%c59_243] : memref<64xf32, #tpu.memory_space<smem>>
    %960 = vector.broadcast %959 : f32 to vector<8x128xf32>
    %961 = arith.mulf %960, %958 : vector<8x128xf32>
    %962 = arith.addf %946, %961 : vector<8x128xf32>
    %c60 = arith.constant 60 : index
    %963 = memref.load %arg1[%c60] : memref<64xf32, #tpu.memory_space<smem>>
    %964 = vector.broadcast %963 : f32 to vector<8x128xf32>
    %965 = arith.mulf %0, %964 : vector<8x128xf32>
    %c60_244 = arith.constant 60 : index
    %966 = memref.load %arg2[%c60_244] : memref<64xf32, #tpu.memory_space<smem>>
    %967 = vector.broadcast %966 : f32 to vector<8x128xf32>
    %968 = arith.mulf %1, %967 : vector<8x128xf32>
    %969 = arith.addf %965, %968 : vector<8x128xf32>
    %c60_245 = arith.constant 60 : index
    %970 = memref.load %arg3[%c60_245] : memref<64xf32, #tpu.memory_space<smem>>
    %971 = vector.broadcast %970 : f32 to vector<8x128xf32>
    %972 = arith.addf %969, %971 : vector<8x128xf32>
    %cst_246 = arith.constant 0.000000e+00 : f32
    %973 = vector.broadcast %cst_246 : f32 to vector<8x128xf32>
    %974 = arith.maximumf %972, %973 : vector<8x128xf32>
    %c60_247 = arith.constant 60 : index
    %975 = memref.load %arg4[%c60_247] : memref<64xf32, #tpu.memory_space<smem>>
    %976 = vector.broadcast %975 : f32 to vector<8x128xf32>
    %977 = arith.mulf %976, %974 : vector<8x128xf32>
    %978 = arith.addf %962, %977 : vector<8x128xf32>
    %c61 = arith.constant 61 : index
    %979 = memref.load %arg1[%c61] : memref<64xf32, #tpu.memory_space<smem>>
    %980 = vector.broadcast %979 : f32 to vector<8x128xf32>
    %981 = arith.mulf %0, %980 : vector<8x128xf32>
    %c61_248 = arith.constant 61 : index
    %982 = memref.load %arg2[%c61_248] : memref<64xf32, #tpu.memory_space<smem>>
    %983 = vector.broadcast %982 : f32 to vector<8x128xf32>
    %984 = arith.mulf %1, %983 : vector<8x128xf32>
    %985 = arith.addf %981, %984 : vector<8x128xf32>
    %c61_249 = arith.constant 61 : index
    %986 = memref.load %arg3[%c61_249] : memref<64xf32, #tpu.memory_space<smem>>
    %987 = vector.broadcast %986 : f32 to vector<8x128xf32>
    %988 = arith.addf %985, %987 : vector<8x128xf32>
    %cst_250 = arith.constant 0.000000e+00 : f32
    %989 = vector.broadcast %cst_250 : f32 to vector<8x128xf32>
    %990 = arith.maximumf %988, %989 : vector<8x128xf32>
    %c61_251 = arith.constant 61 : index
    %991 = memref.load %arg4[%c61_251] : memref<64xf32, #tpu.memory_space<smem>>
    %992 = vector.broadcast %991 : f32 to vector<8x128xf32>
    %993 = arith.mulf %992, %990 : vector<8x128xf32>
    %994 = arith.addf %978, %993 : vector<8x128xf32>
    %c62 = arith.constant 62 : index
    %995 = memref.load %arg1[%c62] : memref<64xf32, #tpu.memory_space<smem>>
    %996 = vector.broadcast %995 : f32 to vector<8x128xf32>
    %997 = arith.mulf %0, %996 : vector<8x128xf32>
    %c62_252 = arith.constant 62 : index
    %998 = memref.load %arg2[%c62_252] : memref<64xf32, #tpu.memory_space<smem>>
    %999 = vector.broadcast %998 : f32 to vector<8x128xf32>
    %1000 = arith.mulf %1, %999 : vector<8x128xf32>
    %1001 = arith.addf %997, %1000 : vector<8x128xf32>
    %c62_253 = arith.constant 62 : index
    %1002 = memref.load %arg3[%c62_253] : memref<64xf32, #tpu.memory_space<smem>>
    %1003 = vector.broadcast %1002 : f32 to vector<8x128xf32>
    %1004 = arith.addf %1001, %1003 : vector<8x128xf32>
    %cst_254 = arith.constant 0.000000e+00 : f32
    %1005 = vector.broadcast %cst_254 : f32 to vector<8x128xf32>
    %1006 = arith.maximumf %1004, %1005 : vector<8x128xf32>
    %c62_255 = arith.constant 62 : index
    %1007 = memref.load %arg4[%c62_255] : memref<64xf32, #tpu.memory_space<smem>>
    %1008 = vector.broadcast %1007 : f32 to vector<8x128xf32>
    %1009 = arith.mulf %1008, %1006 : vector<8x128xf32>
    %1010 = arith.addf %994, %1009 : vector<8x128xf32>
    %c63 = arith.constant 63 : index
    %1011 = memref.load %arg1[%c63] : memref<64xf32, #tpu.memory_space<smem>>
    %1012 = vector.broadcast %1011 : f32 to vector<8x128xf32>
    %1013 = arith.mulf %0, %1012 : vector<8x128xf32>
    %c63_256 = arith.constant 63 : index
    %1014 = memref.load %arg2[%c63_256] : memref<64xf32, #tpu.memory_space<smem>>
    %1015 = vector.broadcast %1014 : f32 to vector<8x128xf32>
    %1016 = arith.mulf %1, %1015 : vector<8x128xf32>
    %1017 = arith.addf %1013, %1016 : vector<8x128xf32>
    %c63_257 = arith.constant 63 : index
    %1018 = memref.load %arg3[%c63_257] : memref<64xf32, #tpu.memory_space<smem>>
    %1019 = vector.broadcast %1018 : f32 to vector<8x128xf32>
    %1020 = arith.addf %1017, %1019 : vector<8x128xf32>
    %cst_258 = arith.constant 0.000000e+00 : f32
    %1021 = vector.broadcast %cst_258 : f32 to vector<8x128xf32>
    %1022 = arith.maximumf %1020, %1021 : vector<8x128xf32>
    %c63_259 = arith.constant 63 : index
    %1023 = memref.load %arg4[%c63_259] : memref<64xf32, #tpu.memory_space<smem>>
    %1024 = vector.broadcast %1023 : f32 to vector<8x128xf32>
    %1025 = arith.mulf %1024, %1022 : vector<8x128xf32>
    %1026 = arith.addf %1010, %1025 : vector<8x128xf32>
    %c0_260 = arith.constant 0 : index
    %1027 = memref.load %arg5[%c0_260] : memref<1xf32, #tpu.memory_space<smem>>
    %1028 = vector.broadcast %1027 : f32 to vector<8x128xf32>
    %1029 = arith.addf %1026, %1028 : vector<8x128xf32>
    %c0_261 = arith.constant 0 : index
    %c0_262 = arith.constant 0 : index
    %1030 = vector.load %arg8[%c0_261, %c0_262] : memref<8x128xf32, #tpu.memory_space<vmem>>, vector<8x128xf32>
    tpu.vector_store %arg8[%c0_261, %c0_262], %1029 {strides = array<i32>} : memref<8x128xf32, #tpu.memory_space<vmem>>, vector<8x128xf32>,
    return
  }
  func.func @transform_0(%arg0: i32) -> i32 {
    %c0_i32 = arith.constant 0 : i32
    %c0_i32_0 = arith.constant 0 : i32
    return %c0_i32 : i32
  }
  func.func @transform_1(%arg0: i32) -> i32 {
    %c0_i32 = arith.constant 0 : i32
    %c0_i32_0 = arith.constant 0 : i32
    return %c0_i32 : i32
  }
  func.func @transform_2(%arg0: i32) -> i32 {
    %c0_i32 = arith.constant 0 : i32
    %c0_i32_0 = arith.constant 0 : i32
    return %c0_i32 : i32
  }
  func.func @transform_3(%arg0: i32) -> i32 {
    %c0_i32 = arith.constant 0 : i32
    %c0_i32_0 = arith.constant 0 : i32
    return %c0_i32 : i32
  }
  func.func @transform_4(%arg0: i32) -> i32 {
    %c0_i32 = arith.constant 0 : i32
    %c0_i32_0 = arith.constant 0 : i32
    return %c0_i32 : i32
  }
  func.func @transform_5(%arg0: i32) -> (i32, i32) {
    %c0_i32 = arith.constant 0 : i32
    %c0_i32_0 = arith.constant 0 : i32
    return %arg0, %c0_i32 : i32, i32
  }
  func.func @transform_6(%arg0: i32) -> (i32, i32) {
    %c0_i32 = arith.constant 0 : i32
    %c0_i32_0 = arith.constant 0 : i32
    return %arg0, %c0_i32 : i32, i32
  }
  func.func @transform_7(%arg0: i32) -> (i32, i32) {
    %c0_i32 = arith.constant 0 : i32
    %c0_i32_0 = arith.constant 0 : i32
    return %arg0, %c0_i32 : i32, i32
  }
}

</mosaic_0001>

<llo_original>
// kernel: tpu_custom_call.1
$region0: #{tpu_custom_call.1}
  #allocation0 [shape = 'u32[]', space=smem, size = 0x4, offset = 0x4, fixed_abs, tag = 'smem constant byte address 0x4 - core index']
  #allocation1 [shape = 'u32[144,128]{1,0:T(1,128)}', space=vmem, size = 0x12000, scoped, tag = 'internal scratch']
  #allocation2 [shape = 'f32[1]{0:T(128)S(6)}', space=smem, size = 0x200, scoped, tag = 'scoped memory for tpu_custom_call.1']
  %s0 = inlined_call_operand.vmem [shape: f32[64], index: 0, kind: input, shape index: {}]
  %s1 = inlined_call_operand.vmem [shape: f32[64], index: 1, kind: input, shape index: {}]
  %s2 = inlined_call_operand.hbm [shape: f32[64], index: 2, kind: input, shape index: {}]
  %s3 = inlined_call_operand.hbm [shape: f32[64], index: 3, kind: input, shape index: {}]
  %s4 = inlined_call_operand.<no memory space> [shape: f32[1], index: 4, kind: input, shape index: {}]
  %s5 = inlined_call_operand.vmem [shape: f32[8,128], index: 5, kind: input, shape index: {}]
  %s6 = inlined_call_operand.vmem [shape: f32[8,128], index: 6, kind: input, shape index: {}]
  %s7 = inlined_call_operand.hbm [shape: f32[8,128], index: 7, kind: output, shape index: {}]
  %s8 = sld [smem:[#allocation0]]
  $region54: #{tpu_custom_call.1} parent=0
    _
  %s10 = ssub.s32 1, %s8
  %s11 = scalar_select 0, %s10, %s8
  %12 = sst [smem:[#allocation2]] %s4
  $region1: #{tpu_custom_call.1} parent=0
    #allocation3 [shape = 'u8[512]{0}', space=smem, size = 0x200, scoped, tag = 'input window, operand 0, single buffered']
    #allocation4 [shape = 's32[1]{0}', space=sflag, size = 0x4, scoped, tag = 'scoped memory for tpu_custom_call.1']
    #allocation5 [shape = 's32[1]{0}', space=sflag, size = 0x4, scoped, tag = 'scoped memory for tpu_custom_call.1']
    #allocation6 [shape = 's32[1]{0}', space=sflag, size = 0x4, scoped, tag = 'scoped memory for tpu_custom_call.1']
    #allocation7 [shape = 'u8[512]{0}', space=smem, size = 0x200, scoped, tag = 'input window, operand 1, single buffered']
    #allocation8 [shape = 's32[1]{0}', space=sflag, size = 0x4, scoped, tag = 'scoped memory for tpu_custom_call.1']
    #allocation9 [shape = 'u8[512]{0}', space=smem, size = 0x200, scoped, tag = 'input window, operand 2, single buffered']
    #allocation10 [shape = 'u8[512]{0}', space=smem, size = 0x200, scoped, tag = 'input window, operand 3, single buffered']
    #allocation11 [shape = 's32[1]{0}', space=sflag, size = 0x4, scoped, tag = 'scoped memory for tpu_custom_call.1']
    #allocation12 [shape = 'u8[4096]{0}', space=vmem, size = 0x1000, scoped, tag = 'output window, operand 0, single buffered']
    %13 = vsyncpa [#allocation6], 0
    %14 = vsyncpa [#allocation8], 0
    %15 = vsyncpa [#allocation5], 0
    %16 = vsyncpa [#allocation11], 0
    %17 = vsyncpa [#allocation4], 0
    // Predicated region
    $region2: #{tpu_custom_call.1} parent=1 // pred_check
      _
    $region3: #{tpu_custom_call.1} parent=1 // pred_check_branch
      %19 = sbr.rel (0) target = $region5
    $region4: #{tpu_custom_call.1} parent=1 // pred_region
      %s21 = ssub.s32 16, 16
      %22 = vsyncadd [#allocation6], %s21
      %s24 = sshll.u32 %s0, 4
      %s25 = int_to_ptr.vmem [resolvable:$true] %s24
      %27 = dma.vmem_to_smem %s25, 16, [#allocation3], [#allocation6]
    $region5: #{tpu_custom_call.1} parent=1 // pred_fallthru
      _
    // Predicated region
    $region6: #{tpu_custom_call.1} parent=1 // pred_check
      _
    $region7: #{tpu_custom_call.1} parent=1 // pred_check_branch
      %29 = sbr.rel (0) target = $region9
    $region8: #{tpu_custom_call.1} parent=1 // pred_region
      %s31 = ssub.s32 16, 16
      %32 = vsyncadd [#allocation8], %s31
      %s34 = sshll.u32 %s1, 4
      %s35 = int_to_ptr.vmem [resolvable:$true] %s34
      %37 = dma.vmem_to_smem %s35, 16, [#allocation7], [#allocation8]
    $region9: #{tpu_custom_call.1} parent=1 // pred_fallthru
      _
    // Predicated region
    $region10: #{tpu_custom_call.1} parent=1 // pred_check
      _
    $region11: #{tpu_custom_call.1} parent=1 // pred_check_branch
      %39 = sbr.rel (0) target = $region13
    $region12: #{tpu_custom_call.1} parent=1 // pred_region
      %s41 = ssub.s32 16, 16
      %42 = vsyncadd [#allocation5], %s41
      %45 = dma.hbm_to_smem %s2, 16, [#allocation9], [#allocation5]
    $region13: #{tpu_custom_call.1} parent=1 // pred_fallthru
      _
    // Predicated region
    $region14: #{tpu_custom_call.1} parent=1 // pred_check
      _
    $region15: #{tpu_custom_call.1} parent=1 // pred_check_branch
      %47 = sbr.rel (0) target = $region17
    $region16: #{tpu_custom_call.1} parent=1 // pred_region
      %s49 = ssub.s32 16, 16
      %50 = vsyncadd [#allocation11], %s49
      %53 = dma.hbm_to_smem %s3, 16, [#allocation10], [#allocation11]
    $region17: #{tpu_custom_call.1} parent=1 // pred_fallthru
      _
    // Predicated region
    $region18: #{tpu_custom_call.1} parent=1 // pred_check
      _
    $region19: #{tpu_custom_call.1} parent=1 // pred_check_branch
      %55 = sbr.rel (0) target = $region21
    $region20: #{tpu_custom_call.1} parent=1 // pred_region
      _
    $region21: #{tpu_custom_call.1} parent=1 // pred_fallthru
      _
    // Predicated region
    $region22: #{tpu_custom_call.1} parent=1 // pred_check
      _
    $region23: #{tpu_custom_call.1} parent=1 // pred_check_branch
      %57 = sbr.rel (0) target = $region25
    $region24: #{tpu_custom_call.1} parent=1 // pred_region
      _
    $region25: #{tpu_custom_call.1} parent=1 // pred_fallthru
      _
    // Predicated region
    $region26: #{tpu_custom_call.1} parent=1 // pred_check
      _
    $region27: #{tpu_custom_call.1} parent=1 // pred_check_branch
      %59 = sbr.rel (0) target = $region29
    $region28: #{tpu_custom_call.1} parent=1 // pred_region
      _
    $region29: #{tpu_custom_call.1} parent=1 // pred_fallthru
      _
    // Predicated region
    $region30: #{tpu_custom_call.1} parent=1 // pred_check
      _
    $region31: #{tpu_custom_call.1} parent=1 // pred_check_branch
      %61 = sbr.rel (0) target = $region33
    $region32: #{tpu_custom_call.1} parent=1 // pred_region
      %62 = dma.done [#allocation6], 16
    $region33: #{tpu_custom_call.1} parent=1 // pred_fallthru
      _
    // Predicated region
    $region34: #{tpu_custom_call.1} parent=1 // pred_check
      _
    $region35: #{tpu_custom_call.1} parent=1 // pred_check_branch
      %64 = sbr.rel (0) target = $region37
    $region36: #{tpu_custom_call.1} parent=1 // pred_region
      %65 = dma.done [#allocation8], 16
    $region37: #{tpu_custom_call.1} parent=1 // pred_fallthru
      _
    // Predicated region
    $region38: #{tpu_custom_call.1} parent=1 // pred_check
      _
    $region39: #{tpu_custom_call.1} parent=1 // pred_check_branch
      %67 = sbr.rel (0) target = $region41
    $region40: #{tpu_custom_call.1} parent=1 // pred_region
      %68 = dma.done [#allocation5], 16
    $region41: #{tpu_custom_call.1} parent=1 // pred_fallthru
      _
    // Predicated region
    $region42: #{tpu_custom_call.1} parent=1 // pred_check
      _
    $region43: #{tpu_custom_call.1} parent=1 // pred_check_branch
      %70 = sbr.rel (0) target = $region45
    $region44: #{tpu_custom_call.1} parent=1 // pred_region
      %71 = dma.done [#allocation11], 16
    $region45: #{tpu_custom_call.1} parent=1 // pred_fallthru
      _
    %72 = sfence
    %v73 = vld [vmem:[%s5] sm:$0xff]
    %v74 = vld [vmem:[%s6] sm:$0xff]
    %s75 = sld [smem:[#allocation3]]
    %v76 = vstv %s75
    %v77 = vmul.f32 %v73, %v76
    %s78 = sld [smem:[#allocation7]]
    %v79 = vstv %s78
    %v80 = vmul.f32 %v74, %v79
    %v81 = vadd.f32 %v77, %v80
    %s82 = sld [smem:[#allocation9]]
    %v83 = vstv %s82
    %v84 = vadd.f32 %v81, %v83
    %v85 = vmax.f32 %v84, 0.0
    %s86 = sld [smem:[#allocation10]]
    %v87 = vstv %s86
    %v88 = vmul.f32 %v87, %v85
    %v89 = vadd.f32 %v88, 0.0
    %s90 = sld [smem:[#allocation3 + $0x1]]
    %v91 = vstv %s90
    %v92 = vmul.f32 %v73, %v91
    %s93 = sld [smem:[#allocation7 + $0x1]]
    %v94 = vstv %s93
    %v95 = vmul.f32 %v74, %v94
    %v96 = vadd.f32 %v92, %v95
    %s97 = sld [smem:[#allocation9 + $0x1]]
    %v98 = vstv %s97
    %v99 = vadd.f32 %v96, %v98
    %v100 = vmax.f32 %v99, 0.0
    %s101 = sld [smem:[#allocation10 + $0x1]]
    %v102 = vstv %s101
    %v103 = vmul.f32 %v102, %v100
    %v104 = vadd.f32 %v89, %v103
    %s105 = sld [smem:[#allocation3 + $0x2]]
    %v106 = vstv %s105
    %v107 = vmul.f32 %v73, %v106
    %s108 = sld [smem:[#allocation7 + $0x2]]
    %v109 = vstv %s108
    %v110 = vmul.f32 %v74, %v109
    %v111 = vadd.f32 %v107, %v110
    %s112 = sld [smem:[#allocation9 + $0x2]]
    %v113 = vstv %s112
    %v114 = vadd.f32 %v111, %v113
    %v115 = vmax.f32 %v114, 0.0
    %s116 = sld [smem:[#allocation10 + $0x2]]
    %v117 = vstv %s116
    %v118 = vmul.f32 %v117, %v115
    %v119 = vadd.f32 %v104, %v118
    %s120 = sld [smem:[#allocation3 + $0x3]]
    %v121 = vstv %s120
    %v122 = vmul.f32 %v73, %v121
    %s123 = sld [smem:[#allocation7 + $0x3]]
    %v124 = vstv %s123
    %v125 = vmul.f32 %v74, %v124
    %v126 = vadd.f32 %v122, %v125
    %s127 = sld [smem:[#allocation9 + $0x3]]
    %v128 = vstv %s127
    %v129 = vadd.f32 %v126, %v128
    %v130 = vmax.f32 %v129, 0.0
    %s131 = sld [smem:[#allocation10 + $0x3]]
    %v132 = vstv %s131
    %v133 = vmul.f32 %v132, %v130
    %v134 = vadd.f32 %v119, %v133
    %s135 = sld [smem:[#allocation3 + $0x4]]
    %v136 = vstv %s135
    %v137 = vmul.f32 %v73, %v136
    %s138 = sld [smem:[#allocation7 + $0x4]]
    %v139 = vstv %s138
    %v140 = vmul.f32 %v74, %v139
    %v141 = vadd.f32 %v137, %v140
    %s142 = sld [smem:[#allocation9 + $0x4]]
    %v143 = vstv %s142
    %v144 = vadd.f32 %v141, %v143
    %v145 = vmax.f32 %v144, 0.0
    %s146 = sld [smem:[#allocation10 + $0x4]]
    %v147 = vstv %s146
    %v148 = vmul.f32 %v147, %v145
    %v149 = vadd.f32 %v134, %v148
    %s150 = sld [smem:[#allocation3 + $0x5]]
    %v151 = vstv %s150
    %v152 = vmul.f32 %v73, %v151
    %s153 = sld [smem:[#allocation7 + $0x5]]
    %v154 = vstv %s153
    %v155 = vmul.f32 %v74, %v154
    %v156 = vadd.f32 %v152, %v155
    %s157 = sld [smem:[#allocation9 + $0x5]]
    %v158 = vstv %s157
    %v159 = vadd.f32 %v156, %v158
    %v160 = vmax.f32 %v159, 0.0
    %s161 = sld [smem:[#allocation10 + $0x5]]
    %v162 = vstv %s161
    %v163 = vmul.f32 %v162, %v160
    %v164 = vadd.f32 %v149, %v163
    %s165 = sld [smem:[#allocation3 + $0x6]]
    %v166 = vstv %s165
    %v167 = vmul.f32 %v73, %v166
    %s168 = sld [smem:[#allocation7 + $0x6]]
    %v169 = vstv %s168
    %v170 = vmul.f32 %v74, %v169
    %v171 = vadd.f32 %v167, %v170
    %s172 = sld [smem:[#allocation9 + $0x6]]
    %v173 = vstv %s172
    %v174 = vadd.f32 %v171, %v173
    %v175 = vmax.f32 %v174, 0.0
    %s176 = sld [smem:[#allocation10 + $0x6]]
    %v177 = vstv %s176
    %v178 = vmul.f32 %v177, %v175
    %v179 = vadd.f32 %v164, %v178
    %s180 = sld [smem:[#allocation3 + $0x7]]
    %v181 = vstv %s180
    %v182 = vmul.f32 %v73, %v181
    %s183 = sld [smem:[#allocation7 + $0x7]]
    %v184 = vstv %s183
    %v185 = vmul.f32 %v74, %v184
    %v186 = vadd.f32 %v182, %v185
    %s187 = sld [smem:[#allocation9 + $0x7]]
    %v188 = vstv %s187
    %v189 = vadd.f32 %v186, %v188
    %v190 = vmax.f32 %v189, 0.0
    %s191 = sld [smem:[#allocation10 + $0x7]]
    %v192 = vstv %s191
    %v193 = vmul.f32 %v192, %v190
    %v194 = vadd.f32 %v179, %v193
    %s195 = sld [smem:[#allocation3 + $0x8]]
    %v196 = vstv %s195
    %v197 = vmul.f32 %v73, %v196
    %s198 = sld [smem:[#allocation7 + $0x8]]
    %v199 = vstv %s198
    %v200 = vmul.f32 %v74, %v199
    %v201 = vadd.f32 %v197, %v200
    %s202 = sld [smem:[#allocation9 + $0x8]]
    %v203 = vstv %s202
    %v204 = vadd.f32 %v201, %v203
    %v205 = vmax.f32 %v204, 0.0
    %s206 = sld [smem:[#allocation10 + $0x8]]
    %v207 = vstv %s206
    %v208 = vmul.f32 %v207, %v205
    %v209 = vadd.f32 %v194, %v208
    %s210 = sld [smem:[#allocation3 + $0x9]]
    %v211 = vstv %s210
    %v212 = vmul.f32 %v73, %v211
    %s213 = sld [smem:[#allocation7 + $0x9]]
    %v214 = vstv %s213
    %v215 = vmul.f32 %v74, %v214
    %v216 = vadd.f32 %v212, %v215
    %s217 = sld [smem:[#allocation9 + $0x9]]
    %v218 = vstv %s217
    %v219 = vadd.f32 %v216, %v218
    %v220 = vmax.f32 %v219, 0.0
    %s221 = sld [smem:[#allocation10 + $0x9]]
    %v222 = vstv %s221
    %v223 = vmul.f32 %v222, %v220
    %v224 = vadd.f32 %v209, %v223
    %s225 = sld [smem:[#allocation3 + $0xa]]
    %v226 = vstv %s225
    %v227 = vmul.f32 %v73, %v226
    %s228 = sld [smem:[#allocation7 + $0xa]]
    %v229 = vstv %s228
    %v230 = vmul.f32 %v74, %v229
    %v231 = vadd.f32 %v227, %v230
    %s232 = sld [smem:[#allocation9 + $0xa]]
    %v233 = vstv %s232
    %v234 = vadd.f32 %v231, %v233
    %v235 = vmax.f32 %v234, 0.0
    %s236 = sld [smem:[#allocation10 + $0xa]]
    %v237 = vstv %s236
    %v238 = vmul.f32 %v237, %v235
    %v239 = vadd.f32 %v224, %v238
    %s240 = sld [smem:[#allocation3 + $0xb]]
    %v241 = vstv %s240
    %v242 = vmul.f32 %v73, %v241
    %s243 = sld [smem:[#allocation7 + $0xb]]
    %v244 = vstv %s243
    %v245 = vmul.f32 %v74, %v244
    %v246 = vadd.f32 %v242, %v245
    %s247 = sld [smem:[#allocation9 + $0xb]]
    %v248 = vstv %s247
    %v249 = vadd.f32 %v246, %v248
    %v250 = vmax.f32 %v249, 0.0
    %s251 = sld [smem:[#allocation10 + $0xb]]
    %v252 = vstv %s251
    %v253 = vmul.f32 %v252, %v250
    %v254 = vadd.f32 %v239, %v253
    %s255 = sld [smem:[#allocation3 + $0xc]]
    %v256 = vstv %s255
    %v257 = vmul.f32 %v73, %v256
    %s258 = sld [smem:[#allocation7 + $0xc]]
    %v259 = vstv %s258
    %v260 = vmul.f32 %v74, %v259
    %v261 = vadd.f32 %v257, %v260
    %s262 = sld [smem:[#allocation9 + $0xc]]
    %v263 = vstv %s262
    %v264 = vadd.f32 %v261, %v263
    %v265 = vmax.f32 %v264, 0.0
    %s266 = sld [smem:[#allocation10 + $0xc]]
    %v267 = vstv %s266
    %v268 = vmul.f32 %v267, %v265
    %v269 = vadd.f32 %v254, %v268
    %s270 = sld [smem:[#allocation3 + $0xd]]
    %v271 = vstv %s270
    %v272 = vmul.f32 %v73, %v271
    %s273 = sld [smem:[#allocation7 + $0xd]]
    %v274 = vstv %s273
    %v275 = vmul.f32 %v74, %v274
    %v276 = vadd.f32 %v272, %v275
    %s277 = sld [smem:[#allocation9 + $0xd]]
    %v278 = vstv %s277
    %v279 = vadd.f32 %v276, %v278
    %v280 = vmax.f32 %v279, 0.0
    %s281 = sld [smem:[#allocation10 + $0xd]]
    %v282 = vstv %s281
    %v283 = vmul.f32 %v282, %v280
    %v284 = vadd.f32 %v269, %v283
    %s285 = sld [smem:[#allocation3 + $0xe]]
    %v286 = vstv %s285
    %v287 = vmul.f32 %v73, %v286
    %s288 = sld [smem:[#allocation7 + $0xe]]
    %v289 = vstv %s288
    %v290 = vmul.f32 %v74, %v289
    %v291 = vadd.f32 %v287, %v290
    %s292 = sld [smem:[#allocation9 + $0xe]]
    %v293 = vstv %s292
    %v294 = vadd.f32 %v291, %v293
    %v295 = vmax.f32 %v294, 0.0
    %s296 = sld [smem:[#allocation10 + $0xe]]
    %v297 = vstv %s296
    %v298 = vmul.f32 %v297, %v295
    %v299 = vadd.f32 %v284, %v298
    %s300 = sld [smem:[#allocation3 + $0xf]]
    %v301 = vstv %s300
    %v302 = vmul.f32 %v73, %v301
    %s303 = sld [smem:[#allocation7 + $0xf]]
    %v304 = vstv %s303
    %v305 = vmul.f32 %v74, %v304
    %v306 = vadd.f32 %v302, %v305
    %s307 = sld [smem:[#allocation9 + $0xf]]
    %v308 = vstv %s307
    %v309 = vadd.f32 %v306, %v308
    %v310 = vmax.f32 %v309, 0.0
    %s311 = sld [smem:[#allocation10 + $0xf]]
    %v312 = vstv %s311
    %v313 = vmul.f32 %v312, %v310
    %v314 = vadd.f32 %v299, %v313
    %s315 = sld [smem:[#allocation3 + $0x10]]
    %v316 = vstv %s315
    %v317 = vmul.f32 %v73, %v316
    %s318 = sld [smem:[#allocation7 + $0x10]]
    %v319 = vstv %s318
    %v320 = vmul.f32 %v74, %v319
    %v321 = vadd.f32 %v317, %v320
    %s322 = sld [smem:[#allocation9 + $0x10]]
    %v323 = vstv %s322
    %v324 = vadd.f32 %v321, %v323
    %v325 = vmax.f32 %v324, 0.0
    %s326 = sld [smem:[#allocation10 + $0x10]]
    %v327 = vstv %s326
    %v328 = vmul.f32 %v327, %v325
    %v329 = vadd.f32 %v314, %v328
    %s330 = sld [smem:[#allocation3 + $0x11]]
    %v331 = vstv %s330
    %v332 = vmul.f32 %v73, %v331
    %s333 = sld [smem:[#allocation7 + $0x11]]
    %v334 = vstv %s333
    %v335 = vmul.f32 %v74, %v334
    %v336 = vadd.f32 %v332, %v335
    %s337 = sld [smem:[#allocation9 + $0x11]]
    %v338 = vstv %s337
    %v339 = vadd.f32 %v336, %v338
    %v340 = vmax.f32 %v339, 0.0
    %s341 = sld [smem:[#allocation10 + $0x11]]
    %v342 = vstv %s341
    %v343 = vmul.f32 %v342, %v340
    %v344 = vadd.f32 %v329, %v343
    %s345 = sld [smem:[#allocation3 + $0x12]]
    %v346 = vstv %s345
    %v347 = vmul.f32 %v73, %v346
    %s348 = sld [smem:[#allocation7 + $0x12]]
    %v349 = vstv %s348
    %v350 = vmul.f32 %v74, %v349
    %v351 = vadd.f32 %v347, %v350
    %s352 = sld [smem:[#allocation9 + $0x12]]
    %v353 = vstv %s352
    %v354 = vadd.f32 %v351, %v353
    %v355 = vmax.f32 %v354, 0.0
    %s356 = sld [smem:[#allocation10 + $0x12]]
    %v357 = vstv %s356
    %v358 = vmul.f32 %v357, %v355
    %v359 = vadd.f32 %v344, %v358
    %s360 = sld [smem:[#allocation3 + $0x13]]
    %v361 = vstv %s360
    %v362 = vmul.f32 %v73, %v361
    %s363 = sld [smem:[#allocation7 + $0x13]]
    %v364 = vstv %s363
    %v365 = vmul.f32 %v74, %v364
    %v366 = vadd.f32 %v362, %v365
    %s367 = sld [smem:[#allocation9 + $0x13]]
    %v368 = vstv %s367
    %v369 = vadd.f32 %v366, %v368
    %v370 = vmax.f32 %v369, 0.0
    %s371 = sld [smem:[#allocation10 + $0x13]]
    %v372 = vstv %s371
    %v373 = vmul.f32 %v372, %v370
    %v374 = vadd.f32 %v359, %v373
    %s375 = sld [smem:[#allocation3 + $0x14]]
    %v376 = vstv %s375
    %v377 = vmul.f32 %v73, %v376
    %s378 = sld [smem:[#allocation7 + $0x14]]
    %v379 = vstv %s378
    %v380 = vmul.f32 %v74, %v379
    %v381 = vadd.f32 %v377, %v380
    %s382 = sld [smem:[#allocation9 + $0x14]]
    %v383 = vstv %s382
    %v384 = vadd.f32 %v381, %v383
    %v385 = vmax.f32 %v384, 0.0
    %s386 = sld [smem:[#allocation10 + $0x14]]
    %v387 = vstv %s386
    %v388 = vmul.f32 %v387, %v385
    %v389 = vadd.f32 %v374, %v388
    %s390 = sld [smem:[#allocation3 + $0x15]]
    %v391 = vstv %s390
    %v392 = vmul.f32 %v73, %v391
    %s393 = sld [smem:[#allocation7 + $0x15]]
    %v394 = vstv %s393
    %v395 = vmul.f32 %v74, %v394
    %v396 = vadd.f32 %v392, %v395
    %s397 = sld [smem:[#allocation9 + $0x15]]
    %v398 = vstv %s397
    %v399 = vadd.f32 %v396, %v398
    %v400 = vmax.f32 %v399, 0.0
    %s401 = sld [smem:[#allocation10 + $0x15]]
    %v402 = vstv %s401
    %v403 = vmul.f32 %v402, %v400
    %v404 = vadd.f32 %v389, %v403
    %s405 = sld [smem:[#allocation3 + $0x16]]
    %v406 = vstv %s405
    %v407 = vmul.f32 %v73, %v406
    %s408 = sld [smem:[#allocation7 + $0x16]]
    %v409 = vstv %s408
    %v410 = vmul.f32 %v74, %v409
    %v411 = vadd.f32 %v407, %v410
    %s412 = sld [smem:[#allocation9 + $0x16]]
    %v413 = vstv %s412
    %v414 = vadd.f32 %v411, %v413
    %v415 = vmax.f32 %v414, 0.0
    %s416 = sld [smem:[#allocation10 + $0x16]]
    %v417 = vstv %s416
    %v418 = vmul.f32 %v417, %v415
    %v419 = vadd.f32 %v404, %v418
    %s420 = sld [smem:[#allocation3 + $0x17]]
    %v421 = vstv %s420
    %v422 = vmul.f32 %v73, %v421
    %s423 = sld [smem:[#allocation7 + $0x17]]
    %v424 = vstv %s423
    %v425 = vmul.f32 %v74, %v424
    %v426 = vadd.f32 %v422, %v425
    %s427 = sld [smem:[#allocation9 + $0x17]]
    %v428 = vstv %s427
    %v429 = vadd.f32 %v426, %v428
    %v430 = vmax.f32 %v429, 0.0
    %s431 = sld [smem:[#allocation10 + $0x17]]
    %v432 = vstv %s431
    %v433 = vmul.f32 %v432, %v430
    %v434 = vadd.f32 %v419, %v433
    %s435 = sld [smem:[#allocation3 + $0x18]]
    %v436 = vstv %s435
    %v437 = vmul.f32 %v73, %v436
    %s438 = sld [smem:[#allocation7 + $0x18]]
    %v439 = vstv %s438
    %v440 = vmul.f32 %v74, %v439
    %v441 = vadd.f32 %v437, %v440
    %s442 = sld [smem:[#allocation9 + $0x18]]
    %v443 = vstv %s442
    %v444 = vadd.f32 %v441, %v443
    %v445 = vmax.f32 %v444, 0.0
    %s446 = sld [smem:[#allocation10 + $0x18]]
    %v447 = vstv %s446
    %v448 = vmul.f32 %v447, %v445
    %v449 = vadd.f32 %v434, %v448
    %s450 = sld [smem:[#allocation3 + $0x19]]
    %v451 = vstv %s450
    %v452 = vmul.f32 %v73, %v451
    %s453 = sld [smem:[#allocation7 + $0x19]]
    %v454 = vstv %s453
    %v455 = vmul.f32 %v74, %v454
    %v456 = vadd.f32 %v452, %v455
    %s457 = sld [smem:[#allocation9 + $0x19]]
    %v458 = vstv %s457
    %v459 = vadd.f32 %v456, %v458
    %v460 = vmax.f32 %v459, 0.0
    %s461 = sld [smem:[#allocation10 + $0x19]]
    %v462 = vstv %s461
    %v463 = vmul.f32 %v462, %v460
    %v464 = vadd.f32 %v449, %v463
    %s465 = sld [smem:[#allocation3 + $0x1a]]
    %v466 = vstv %s465
    %v467 = vmul.f32 %v73, %v466
    %s468 = sld [smem:[#allocation7 + $0x1a]]
    %v469 = vstv %s468
    %v470 = vmul.f32 %v74, %v469
    %v471 = vadd.f32 %v467, %v470
    %s472 = sld [smem:[#allocation9 + $0x1a]]
    %v473 = vstv %s472
    %v474 = vadd.f32 %v471, %v473
    %v475 = vmax.f32 %v474, 0.0
    %s476 = sld [smem:[#allocation10 + $0x1a]]
    %v477 = vstv %s476
    %v478 = vmul.f32 %v477, %v475
    %v479 = vadd.f32 %v464, %v478
    %s480 = sld [smem:[#allocation3 + $0x1b]]
    %v481 = vstv %s480
    %v482 = vmul.f32 %v73, %v481
    %s483 = sld [smem:[#allocation7 + $0x1b]]
    %v484 = vstv %s483
    %v485 = vmul.f32 %v74, %v484
    %v486 = vadd.f32 %v482, %v485
    %s487 = sld [smem:[#allocation9 + $0x1b]]
    %v488 = vstv %s487
    %v489 = vadd.f32 %v486, %v488
    %v490 = vmax.f32 %v489, 0.0
    %s491 = sld [smem:[#allocation10 + $0x1b]]
    %v492 = vstv %s491
    %v493 = vmul.f32 %v492, %v490
    %v494 = vadd.f32 %v479, %v493
    %s495 = sld [smem:[#allocation3 + $0x1c]]
    %v496 = vstv %s495
    %v497 = vmul.f32 %v73, %v496
    %s498 = sld [smem:[#allocation7 + $0x1c]]
    %v499 = vstv %s498
    %v500 = vmul.f32 %v74, %v499
    %v501 = vadd.f32 %v497, %v500
    %s502 = sld [smem:[#allocation9 + $0x1c]]
    %v503 = vstv %s502
    %v504 = vadd.f32 %v501, %v503
    %v505 = vmax.f32 %v504, 0.0
    %s506 = sld [smem:[#allocation10 + $0x1c]]
    %v507 = vstv %s506
    %v508 = vmul.f32 %v507, %v505
    %v509 = vadd.f32 %v494, %v508
    %s510 = sld [smem:[#allocation3 + $0x1d]]
    %v511 = vstv %s510
    %v512 = vmul.f32 %v73, %v511
    %s513 = sld [smem:[#allocation7 + $0x1d]]
    %v514 = vstv %s513
    %v515 = vmul.f32 %v74, %v514
    %v516 = vadd.f32 %v512, %v515
    %s517 = sld [smem:[#allocation9 + $0x1d]]
    %v518 = vstv %s517
    %v519 = vadd.f32 %v516, %v518
    %v520 = vmax.f32 %v519, 0.0
    %s521 = sld [smem:[#allocation10 + $0x1d]]
    %v522 = vstv %s521
    %v523 = vmul.f32 %v522, %v520
    %v524 = vadd.f32 %v509, %v523
    %s525 = sld [smem:[#allocation3 + $0x1e]]
    %v526 = vstv %s525
    %v527 = vmul.f32 %v73, %v526
    %s528 = sld [smem:[#allocation7 + $0x1e]]
    %v529 = vstv %s528
    %v530 = vmul.f32 %v74, %v529
    %v531 = vadd.f32 %v527, %v530
    %s532 = sld [smem:[#allocation9 + $0x1e]]
    %v533 = vstv %s532
    %v534 = vadd.f32 %v531, %v533
    %v535 = vmax.f32 %v534, 0.0
    %s536 = sld [smem:[#allocation10 + $0x1e]]
    %v537 = vstv %s536
    %v538 = vmul.f32 %v537, %v535
    %v539 = vadd.f32 %v524, %v538
    %s540 = sld [smem:[#allocation3 + $0x1f]]
    %v541 = vstv %s540
    %v542 = vmul.f32 %v73, %v541
    %s543 = sld [smem:[#allocation7 + $0x1f]]
    %v544 = vstv %s543
    %v545 = vmul.f32 %v74, %v544
    %v546 = vadd.f32 %v542, %v545
    %s547 = sld [smem:[#allocation9 + $0x1f]]
    %v548 = vstv %s547
    %v549 = vadd.f32 %v546, %v548
    %v550 = vmax.f32 %v549, 0.0
    %s551 = sld [smem:[#allocation10 + $0x1f]]
    %v552 = vstv %s551
    %v553 = vmul.f32 %v552, %v550
    %v554 = vadd.f32 %v539, %v553
    %s555 = sld [smem:[#allocation3 + $0x20]]
    %v556 = vstv %s555
    %v557 = vmul.f32 %v73, %v556
    %s558 = sld [smem:[#allocation7 + $0x20]]
    %v559 = vstv %s558
    %v560 = vmul.f32 %v74, %v559
    %v561 = vadd.f32 %v557, %v560
    %s562 = sld [smem:[#allocation9 + $0x20]]
    %v563 = vstv %s562
    %v564 = vadd.f32 %v561, %v563
    %v565 = vmax.f32 %v564, 0.0
    %s566 = sld [smem:[#allocation10 + $0x20]]
    %v567 = vstv %s566
    %v568 = vmul.f32 %v567, %v565
    %v569 = vadd.f32 %v554, %v568
    %s570 = sld [smem:[#allocation3 + $0x21]]
    %v571 = vstv %s570
    %v572 = vmul.f32 %v73, %v571
    %s573 = sld [smem:[#allocation7 + $0x21]]
    %v574 = vstv %s573
    %v575 = vmul.f32 %v74, %v574
    %v576 = vadd.f32 %v572, %v575
    %s577 = sld [smem:[#allocation9 + $0x21]]
    %v578 = vstv %s577
    %v579 = vadd.f32 %v576, %v578
    %v580 = vmax.f32 %v579, 0.0
    %s581 = sld [smem:[#allocation10 + $0x21]]
    %v582 = vstv %s581
    %v583 = vmul.f32 %v582, %v580
    %v584 = vadd.f32 %v569, %v583
    %s585 = sld [smem:[#allocation3 + $0x22]]
    %v586 = vstv %s585
    %v587 = vmul.f32 %v73, %v586
    %s588 = sld [smem:[#allocation7 + $0x22]]
    %v589 = vstv %s588
    %v590 = vmul.f32 %v74, %v589
    %v591 = vadd.f32 %v587, %v590
    %s592 = sld [smem:[#allocation9 + $0x22]]
    %v593 = vstv %s592
    %v594 = vadd.f32 %v591, %v593
    %v595 = vmax.f32 %v594, 0.0
    %s596 = sld [smem:[#allocation10 + $0x22]]
    %v597 = vstv %s596
    %v598 = vmul.f32 %v597, %v595
    %v599 = vadd.f32 %v584, %v598
    %s600 = sld [smem:[#allocation3 + $0x23]]
    %v601 = vstv %s600
    %v602 = vmul.f32 %v73, %v601
    %s603 = sld [smem:[#allocation7 + $0x23]]
    %v604 = vstv %s603
    %v605 = vmul.f32 %v74, %v604
    %v606 = vadd.f32 %v602, %v605
    %s607 = sld [smem:[#allocation9 + $0x23]]
    %v608 = vstv %s607
    %v609 = vadd.f32 %v606, %v608
    %v610 = vmax.f32 %v609, 0.0
    %s611 = sld [smem:[#allocation10 + $0x23]]
    %v612 = vstv %s611
    %v613 = vmul.f32 %v612, %v610
    %v614 = vadd.f32 %v599, %v613
    %s615 = sld [smem:[#allocation3 + $0x24]]
    %v616 = vstv %s615
    %v617 = vmul.f32 %v73, %v616
    %s618 = sld [smem:[#allocation7 + $0x24]]
    %v619 = vstv %s618
    %v620 = vmul.f32 %v74, %v619
    %v621 = vadd.f32 %v617, %v620
    %s622 = sld [smem:[#allocation9 + $0x24]]
    %v623 = vstv %s622
    %v624 = vadd.f32 %v621, %v623
    %v625 = vmax.f32 %v624, 0.0
    %s626 = sld [smem:[#allocation10 + $0x24]]
    %v627 = vstv %s626
    %v628 = vmul.f32 %v627, %v625
    %v629 = vadd.f32 %v614, %v628
    %s630 = sld [smem:[#allocation3 + $0x25]]
    %v631 = vstv %s630
    %v632 = vmul.f32 %v73, %v631
    %s633 = sld [smem:[#allocation7 + $0x25]]
    %v634 = vstv %s633
    %v635 = vmul.f32 %v74, %v634
    %v636 = vadd.f32 %v632, %v635
    %s637 = sld [smem:[#allocation9 + $0x25]]
    %v638 = vstv %s637
    %v639 = vadd.f32 %v636, %v638
    %v640 = vmax.f32 %v639, 0.0
    %s641 = sld [smem:[#allocation10 + $0x25]]
    %v642 = vstv %s641
    %v643 = vmul.f32 %v642, %v640
    %v644 = vadd.f32 %v629, %v643
    %s645 = sld [smem:[#allocation3 + $0x26]]
    %v646 = vstv %s645
    %v647 = vmul.f32 %v73, %v646
    %s648 = sld [smem:[#allocation7 + $0x26]]
    %v649 = vstv %s648
    %v650 = vmul.f32 %v74, %v649
    %v651 = vadd.f32 %v647, %v650
    %s652 = sld [smem:[#allocation9 + $0x26]]
    %v653 = vstv %s652
    %v654 = vadd.f32 %v651, %v653
    %v655 = vmax.f32 %v654, 0.0
    %s656 = sld [smem:[#allocation10 + $0x26]]
    %v657 = vstv %s656
    %v658 = vmul.f32 %v657, %v655
    %v659 = vadd.f32 %v644, %v658
    %s660 = sld [smem:[#allocation3 + $0x27]]
    %v661 = vstv %s660
    %v662 = vmul.f32 %v73, %v661
    %s663 = sld [smem:[#allocation7 + $0x27]]
    %v664 = vstv %s663
    %v665 = vmul.f32 %v74, %v664
    %v666 = vadd.f32 %v662, %v665
    %s667 = sld [smem:[#allocation9 + $0x27]]
    %v668 = vstv %s667
    %v669 = vadd.f32 %v666, %v668
    %v670 = vmax.f32 %v669, 0.0
    %s671 = sld [smem:[#allocation10 + $0x27]]
    %v672 = vstv %s671
    %v673 = vmul.f32 %v672, %v670
    %v674 = vadd.f32 %v659, %v673
    %s675 = sld [smem:[#allocation3 + $0x28]]
    %v676 = vstv %s675
    %v677 = vmul.f32 %v73, %v676
    %s678 = sld [smem:[#allocation7 + $0x28]]
    %v679 = vstv %s678
    %v680 = vmul.f32 %v74, %v679
    %v681 = vadd.f32 %v677, %v680
    %s682 = sld [smem:[#allocation9 + $0x28]]
    %v683 = vstv %s682
    %v684 = vadd.f32 %v681, %v683
    %v685 = vmax.f32 %v684, 0.0
    %s686 = sld [smem:[#allocation10 + $0x28]]
    %v687 = vstv %s686
    %v688 = vmul.f32 %v687, %v685
    %v689 = vadd.f32 %v674, %v688
    %s690 = sld [smem:[#allocation3 + $0x29]]
    %v691 = vstv %s690
    %v692 = vmul.f32 %v73, %v691
    %s693 = sld [smem:[#allocation7 + $0x29]]
    %v694 = vstv %s693
    %v695 = vmul.f32 %v74, %v694
    %v696 = vadd.f32 %v692, %v695
    %s697 = sld [smem:[#allocation9 + $0x29]]
    %v698 = vstv %s697
    %v699 = vadd.f32 %v696, %v698
    %v700 = vmax.f32 %v699, 0.0
    %s701 = sld [smem:[#allocation10 + $0x29]]
    %v702 = vstv %s701
    %v703 = vmul.f32 %v702, %v700
    %v704 = vadd.f32 %v689, %v703
    %s705 = sld [smem:[#allocation3 + $0x2a]]
    %v706 = vstv %s705
    %v707 = vmul.f32 %v73, %v706
    %s708 = sld [smem:[#allocation7 + $0x2a]]
    %v709 = vstv %s708
    %v710 = vmul.f32 %v74, %v709
    %v711 = vadd.f32 %v707, %v710
    %s712 = sld [smem:[#allocation9 + $0x2a]]
    %v713 = vstv %s712
    %v714 = vadd.f32 %v711, %v713
    %v715 = vmax.f32 %v714, 0.0
    %s716 = sld [smem:[#allocation10 + $0x2a]]
    %v717 = vstv %s716
    %v718 = vmul.f32 %v717, %v715
    %v719 = vadd.f32 %v704, %v718
    %s720 = sld [smem:[#allocation3 + $0x2b]]
    %v721 = vstv %s720
    %v722 = vmul.f32 %v73, %v721
    %s723 = sld [smem:[#allocation7 + $0x2b]]
    %v724 = vstv %s723
    %v725 = vmul.f32 %v74, %v724
    %v726 = vadd.f32 %v722, %v725
    %s727 = sld [smem:[#allocation9 + $0x2b]]
    %v728 = vstv %s727
    %v729 = vadd.f32 %v726, %v728
    %v730 = vmax.f32 %v729, 0.0
    %s731 = sld [smem:[#allocation10 + $0x2b]]
    %v732 = vstv %s731
    %v733 = vmul.f32 %v732, %v730
    %v734 = vadd.f32 %v719, %v733
    %s735 = sld [smem:[#allocation3 + $0x2c]]
    %v736 = vstv %s735
    %v737 = vmul.f32 %v73, %v736
    %s738 = sld [smem:[#allocation7 + $0x2c]]
    %v739 = vstv %s738
    %v740 = vmul.f32 %v74, %v739
    %v741 = vadd.f32 %v737, %v740
    %s742 = sld [smem:[#allocation9 + $0x2c]]
    %v743 = vstv %s742
    %v744 = vadd.f32 %v741, %v743
    %v745 = vmax.f32 %v744, 0.0
    %s746 = sld [smem:[#allocation10 + $0x2c]]
    %v747 = vstv %s746
    %v748 = vmul.f32 %v747, %v745
    %v749 = vadd.f32 %v734, %v748
    %s750 = sld [smem:[#allocation3 + $0x2d]]
    %v751 = vstv %s750
    %v752 = vmul.f32 %v73, %v751
    %s753 = sld [smem:[#allocation7 + $0x2d]]
    %v754 = vstv %s753
    %v755 = vmul.f32 %v74, %v754
    %v756 = vadd.f32 %v752, %v755
    %s757 = sld [smem:[#allocation9 + $0x2d]]
    %v758 = vstv %s757
    %v759 = vadd.f32 %v756, %v758
    %v760 = vmax.f32 %v759, 0.0
    %s761 = sld [smem:[#allocation10 + $0x2d]]
    %v762 = vstv %s761
    %v763 = vmul.f32 %v762, %v760
    %v764 = vadd.f32 %v749, %v763
    %s765 = sld [smem:[#allocation3 + $0x2e]]
    %v766 = vstv %s765
    %v767 = vmul.f32 %v73, %v766
    %s768 = sld [smem:[#allocation7 + $0x2e]]
    %v769 = vstv %s768
    %v770 = vmul.f32 %v74, %v769
    %v771 = vadd.f32 %v767, %v770
    %s772 = sld [smem:[#allocation9 + $0x2e]]
    %v773 = vstv %s772
    %v774 = vadd.f32 %v771, %v773
    %v775 = vmax.f32 %v774, 0.0
    %s776 = sld [smem:[#allocation10 + $0x2e]]
    %v777 = vstv %s776
    %v778 = vmul.f32 %v777, %v775
    %v779 = vadd.f32 %v764, %v778
    %s780 = sld [smem:[#allocation3 + $0x2f]]
    %v781 = vstv %s780
    %v782 = vmul.f32 %v73, %v781
    %s783 = sld [smem:[#allocation7 + $0x2f]]
    %v784 = vstv %s783
    %v785 = vmul.f32 %v74, %v784
    %v786 = vadd.f32 %v782, %v785
    %s787 = sld [smem:[#allocation9 + $0x2f]]
    %v788 = vstv %s787
    %v789 = vadd.f32 %v786, %v788
    %v790 = vmax.f32 %v789, 0.0
    %s791 = sld [smem:[#allocation10 + $0x2f]]
    %v792 = vstv %s791
    %v793 = vmul.f32 %v792, %v790
    %v794 = vadd.f32 %v779, %v793
    %s795 = sld [smem:[#allocation3 + $0x30]]
    %v796 = vstv %s795
    %v797 = vmul.f32 %v73, %v796
    %s798 = sld [smem:[#allocation7 + $0x30]]
    %v799 = vstv %s798
    %v800 = vmul.f32 %v74, %v799
    %v801 = vadd.f32 %v797, %v800
    %s802 = sld [smem:[#allocation9 + $0x30]]
    %v803 = vstv %s802
    %v804 = vadd.f32 %v801, %v803
    %v805 = vmax.f32 %v804, 0.0
    %s806 = sld [smem:[#allocation10 + $0x30]]
    %v807 = vstv %s806
    %v808 = vmul.f32 %v807, %v805
    %v809 = vadd.f32 %v794, %v808
    %s810 = sld [smem:[#allocation3 + $0x31]]
    %v811 = vstv %s810
    %v812 = vmul.f32 %v73, %v811
    %s813 = sld [smem:[#allocation7 + $0x31]]
    %v814 = vstv %s813
    %v815 = vmul.f32 %v74, %v814
    %v816 = vadd.f32 %v812, %v815
    %s817 = sld [smem:[#allocation9 + $0x31]]
    %v818 = vstv %s817
    %v819 = vadd.f32 %v816, %v818
    %v820 = vmax.f32 %v819, 0.0
    %s821 = sld [smem:[#allocation10 + $0x31]]
    %v822 = vstv %s821
    %v823 = vmul.f32 %v822, %v820
    %v824 = vadd.f32 %v809, %v823
    %s825 = sld [smem:[#allocation3 + $0x32]]
    %v826 = vstv %s825
    %v827 = vmul.f32 %v73, %v826
    %s828 = sld [smem:[#allocation7 + $0x32]]
    %v829 = vstv %s828
    %v830 = vmul.f32 %v74, %v829
    %v831 = vadd.f32 %v827, %v830
    %s832 = sld [smem:[#allocation9 + $0x32]]
    %v833 = vstv %s832
    %v834 = vadd.f32 %v831, %v833
    %v835 = vmax.f32 %v834, 0.0
    %s836 = sld [smem:[#allocation10 + $0x32]]
    %v837 = vstv %s836
    %v838 = vmul.f32 %v837, %v835
    %v839 = vadd.f32 %v824, %v838
    %s840 = sld [smem:[#allocation3 + $0x33]]
    %v841 = vstv %s840
    %v842 = vmul.f32 %v73, %v841
    %s843 = sld [smem:[#allocation7 + $0x33]]
    %v844 = vstv %s843
    %v845 = vmul.f32 %v74, %v844
    %v846 = vadd.f32 %v842, %v845
    %s847 = sld [smem:[#allocation9 + $0x33]]
    %v848 = vstv %s847
    %v849 = vadd.f32 %v846, %v848
    %v850 = vmax.f32 %v849, 0.0
    %s851 = sld [smem:[#allocation10 + $0x33]]
    %v852 = vstv %s851
    %v853 = vmul.f32 %v852, %v850
    %v854 = vadd.f32 %v839, %v853
    %s855 = sld [smem:[#allocation3 + $0x34]]
    %v856 = vstv %s855
    %v857 = vmul.f32 %v73, %v856
    %s858 = sld [smem:[#allocation7 + $0x34]]
    %v859 = vstv %s858
    %v860 = vmul.f32 %v74, %v859
    %v861 = vadd.f32 %v857, %v860
    %s862 = sld [smem:[#allocation9 + $0x34]]
    %v863 = vstv %s862
    %v864 = vadd.f32 %v861, %v863
    %v865 = vmax.f32 %v864, 0.0
    %s866 = sld [smem:[#allocation10 + $0x34]]
    %v867 = vstv %s866
    %v868 = vmul.f32 %v867, %v865
    %v869 = vadd.f32 %v854, %v868
    %s870 = sld [smem:[#allocation3 + $0x35]]
    %v871 = vstv %s870
    %v872 = vmul.f32 %v73, %v871
    %s873 = sld [smem:[#allocation7 + $0x35]]
    %v874 = vstv %s873
    %v875 = vmul.f32 %v74, %v874
    %v876 = vadd.f32 %v872, %v875
    %s877 = sld [smem:[#allocation9 + $0x35]]
    %v878 = vstv %s877
    %v879 = vadd.f32 %v876, %v878
    %v880 = vmax.f32 %v879, 0.0
    %s881 = sld [smem:[#allocation10 + $0x35]]
    %v882 = vstv %s881
    %v883 = vmul.f32 %v882, %v880
    %v884 = vadd.f32 %v869, %v883
    %s885 = sld [smem:[#allocation3 + $0x36]]
    %v886 = vstv %s885
    %v887 = vmul.f32 %v73, %v886
    %s888 = sld [smem:[#allocation7 + $0x36]]
    %v889 = vstv %s888
    %v890 = vmul.f32 %v74, %v889
    %v891 = vadd.f32 %v887, %v890
    %s892 = sld [smem:[#allocation9 + $0x36]]
    %v893 = vstv %s892
    %v894 = vadd.f32 %v891, %v893
    %v895 = vmax.f32 %v894, 0.0
    %s896 = sld [smem:[#allocation10 + $0x36]]
    %v897 = vstv %s896
    %v898 = vmul.f32 %v897, %v895
    %v899 = vadd.f32 %v884, %v898
    %s900 = sld [smem:[#allocation3 + $0x37]]
    %v901 = vstv %s900
    %v902 = vmul.f32 %v73, %v901
    %s903 = sld [smem:[#allocation7 + $0x37]]
    %v904 = vstv %s903
    %v905 = vmul.f32 %v74, %v904
    %v906 = vadd.f32 %v902, %v905
    %s907 = sld [smem:[#allocation9 + $0x37]]
    %v908 = vstv %s907
    %v909 = vadd.f32 %v906, %v908
    %v910 = vmax.f32 %v909, 0.0
    %s911 = sld [smem:[#allocation10 + $0x37]]
    %v912 = vstv %s911
    %v913 = vmul.f32 %v912, %v910
    %v914 = vadd.f32 %v899, %v913
    %s915 = sld [smem:[#allocation3 + $0x38]]
    %v916 = vstv %s915
    %v917 = vmul.f32 %v73, %v916
    %s918 = sld [smem:[#allocation7 + $0x38]]
    %v919 = vstv %s918
    %v920 = vmul.f32 %v74, %v919
    %v921 = vadd.f32 %v917, %v920
    %s922 = sld [smem:[#allocation9 + $0x38]]
    %v923 = vstv %s922
    %v924 = vadd.f32 %v921, %v923
    %v925 = vmax.f32 %v924, 0.0
    %s926 = sld [smem:[#allocation10 + $0x38]]
    %v927 = vstv %s926
    %v928 = vmul.f32 %v927, %v925
    %v929 = vadd.f32 %v914, %v928
    %s930 = sld [smem:[#allocation3 + $0x39]]
    %v931 = vstv %s930
    %v932 = vmul.f32 %v73, %v931
    %s933 = sld [smem:[#allocation7 + $0x39]]
    %v934 = vstv %s933
    %v935 = vmul.f32 %v74, %v934
    %v936 = vadd.f32 %v932, %v935
    %s937 = sld [smem:[#allocation9 + $0x39]]
    %v938 = vstv %s937
    %v939 = vadd.f32 %v936, %v938
    %v940 = vmax.f32 %v939, 0.0
    %s941 = sld [smem:[#allocation10 + $0x39]]
    %v942 = vstv %s941
    %v943 = vmul.f32 %v942, %v940
    %v944 = vadd.f32 %v929, %v943
    %s945 = sld [smem:[#allocation3 + $0x3a]]
    %v946 = vstv %s945
    %v947 = vmul.f32 %v73, %v946
    %s948 = sld [smem:[#allocation7 + $0x3a]]
    %v949 = vstv %s948
    %v950 = vmul.f32 %v74, %v949
    %v951 = vadd.f32 %v947, %v950
    %s952 = sld [smem:[#allocation9 + $0x3a]]
    %v953 = vstv %s952
    %v954 = vadd.f32 %v951, %v953
    %v955 = vmax.f32 %v954, 0.0
    %s956 = sld [smem:[#allocation10 + $0x3a]]
    %v957 = vstv %s956
    %v958 = vmul.f32 %v957, %v955
    %v959 = vadd.f32 %v944, %v958
    %s960 = sld [smem:[#allocation3 + $0x3b]]
    %v961 = vstv %s960
    %v962 = vmul.f32 %v73, %v961
    %s963 = sld [smem:[#allocation7 + $0x3b]]
    %v964 = vstv %s963
    %v965 = vmul.f32 %v74, %v964
    %v966 = vadd.f32 %v962, %v965
    %s967 = sld [smem:[#allocation9 + $0x3b]]
    %v968 = vstv %s967
    %v969 = vadd.f32 %v966, %v968
    %v970 = vmax.f32 %v969, 0.0
    %s971 = sld [smem:[#allocation10 + $0x3b]]
    %v972 = vstv %s971
    %v973 = vmul.f32 %v972, %v970
    %v974 = vadd.f32 %v959, %v973
    %s975 = sld [smem:[#allocation3 + $0x3c]]
    %v976 = vstv %s975
    %v977 = vmul.f32 %v73, %v976
    %s978 = sld [smem:[#allocation7 + $0x3c]]
    %v979 = vstv %s978
    %v980 = vmul.f32 %v74, %v979
    %v981 = vadd.f32 %v977, %v980
    %s982 = sld [smem:[#allocation9 + $0x3c]]
    %v983 = vstv %s982
    %v984 = vadd.f32 %v981, %v983
    %v985 = vmax.f32 %v984, 0.0
    %s986 = sld [smem:[#allocation10 + $0x3c]]
    %v987 = vstv %s986
    %v988 = vmul.f32 %v987, %v985
    %v989 = vadd.f32 %v974, %v988
    %s990 = sld [smem:[#allocation3 + $0x3d]]
    %v991 = vstv %s990
    %v992 = vmul.f32 %v73, %v991
    %s993 = sld [smem:[#allocation7 + $0x3d]]
    %v994 = vstv %s993
    %v995 = vmul.f32 %v74, %v994
    %v996 = vadd.f32 %v992, %v995
    %s997 = sld [smem:[#allocation9 + $0x3d]]
    %v998 = vstv %s997
    %v999 = vadd.f32 %v996, %v998
    %v1000 = vmax.f32 %v999, 0.0
    %s1001 = sld [smem:[#allocation10 + $0x3d]]
    %v1002 = vstv %s1001
    %v1003 = vmul.f32 %v1002, %v1000
    %v1004 = vadd.f32 %v989, %v1003
    %s1005 = sld [smem:[#allocation3 + $0x3e]]
    %v1006 = vstv %s1005
    %v1007 = vmul.f32 %v73, %v1006
    %s1008 = sld [smem:[#allocation7 + $0x3e]]
    %v1009 = vstv %s1008
    %v1010 = vmul.f32 %v74, %v1009
    %v1011 = vadd.f32 %v1007, %v1010
    %s1012 = sld [smem:[#allocation9 + $0x3e]]
    %v1013 = vstv %s1012
    %v1014 = vadd.f32 %v1011, %v1013
    %v1015 = vmax.f32 %v1014, 0.0
    %s1016 = sld [smem:[#allocation10 + $0x3e]]
    %v1017 = vstv %s1016
    %v1018 = vmul.f32 %v1017, %v1015
    %v1019 = vadd.f32 %v1004, %v1018
    %s1020 = sld [smem:[#allocation3 + $0x3f]]
    %v1021 = vstv %s1020
    %v1022 = vmul.f32 %v73, %v1021
    %s1023 = sld [smem:[#allocation7 + $0x3f]]
    %v1024 = vstv %s1023
    %v1025 = vmul.f32 %v74, %v1024
    %v1026 = vadd.f32 %v1022, %v1025
    %s1027 = sld [smem:[#allocation9 + $0x3f]]
    %v1028 = vstv %s1027
    %v1029 = vadd.f32 %v1026, %v1028
    %v1030 = vmax.f32 %v1029, 0.0
    %s1031 = sld [smem:[#allocation10 + $0x3f]]
    %v1032 = vstv %s1031
    %v1033 = vmul.f32 %v1032, %v1030
    %v1034 = vadd.f32 %v1019, %v1033
    %s1035 = sld [smem:[#allocation2]]
    %v1036 = vstv %s1035
    %v1037 = vadd.f32 %v1034, %v1036
    %1038 = vst [vmem:[#allocation12] sm:$0xff] %v1037
    // Predicated region
    $region46: #{tpu_custom_call.1} parent=1 // pred_check
      _
    $region47: #{tpu_custom_call.1} parent=1 // pred_check_branch
      %1040 = sbr.rel (0) target = $region49
    $region48: #{tpu_custom_call.1} parent=1 // pred_region
      %s1042 = ssub.s32 128, 128
      %1043 = vsyncadd [#allocation4], %s1042
      %s1045 = sshll.u32 [#allocation12], 4
      %s1046 = int_to_ptr.vmem [resolvable:$true] %s1045
      %1048 = dma.vmem_to_hbm [thread:$0]  %s1046, 128, %s7, [#allocation4]
    $region49: #{tpu_custom_call.1} parent=1 // pred_fallthru
      _
    // Predicated region
    $region50: #{tpu_custom_call.1} parent=1 // pred_check
      _
    $region51: #{tpu_custom_call.1} parent=1 // pred_check_branch
      %1050 = sbr.rel (0) target = $region53
    $region52: #{tpu_custom_call.1} parent=1 // pred_region
      %1051 = dma.done [#allocation4], 128
    $region53: #{tpu_custom_call.1} parent=1 // pred_fallthru
      _
    %1052 = vsyncpa [#allocation4], 1
    %1053 = vsyncpa [#allocation5], 1
    %1054 = vsyncpa [#allocation11], 1
    %1055 = vsyncpa [#allocation6], 1
    %1056 = vsyncpa [#allocation8], 1

</llo_original>
